<compile_context>
chip_gen: v5e
topology: v5e:2x2
jax: 0.10.0
libtpu: 0.0.40
codegen_flags: <defaults>
</compile_context>

<pallas_src>
import jax
import jax.numpy as jnp
from jax import lax
from jax.experimental import pallas as pl
from jax.experimental.pallas import tpu as pltpu


def imprint_jigsaw_kernel(scale_ref, x_ref, wt_ref, wcls_ref, pool_ref,
                          out_ref, feat_ref):
    """Fused stand-in backbone (1x1 conv + ReLU + GAP) + l2_norm + scale + fc.

    scale_ref : SMEM (1,)              scalar scale parameter
    x_ref     : VMEM (C, tile_n*HW)    images, lanes sample-major / HW-minor
    wt_ref    : VMEM (F, C)            1x1-conv weight (transposed)
    wcls_ref  : VMEM (Kpad, F)         classifier weight, K zero-padded to 128
    pool_ref  : VMEM (ch*HW, ch)       block-diagonal ones (segmented GAP)
    out_ref   : VMEM (Kpad, tile_n)    logits block (feature-major)
    feat_ref  : VMEM (F, tile_n)       scratch: sum-pooled features
    """
    lc, ch = pool_ref.shape            # chunk lanes (ch*HW), samples per chunk
    hw = lc // ch
    tile_n = feat_ref.shape[1]
    n_chunks = tile_n // ch

    w_t = wt_ref[...]                  # (F, C)  stays resident (weight-stationary)
    pool = pool_ref[...]               # (lc, ch)

    # Conv + ReLU + GAP, chunked over samples so the (F, lc) intermediate is
    # bounded (~256 KiB) independent of tile_n.  Both ops are standard 2D
    # MXU matmuls streaming ch*HW lanes; no per-sample matmuls.
    for j in range(n_chunks):
        xc = x_ref[:, j * lc:(j + 1) * lc]                              # (C, lc)
        y = jnp.maximum(
            jnp.dot(w_t, xc, preferred_element_type=jnp.float32), 0.0)  # (F, lc)
        # segmented sum over each sample's HW lanes == one small MXU matmul
        feat_ref[:, j * ch:(j + 1) * ch] = jnp.dot(
            y, pool, preferred_element_type=jnp.float32)                # (F, ch)

    feat = feat_ref[...]                                                # (F, tile_n)

    # l2_norm exactly as in the PyTorch module, with the GAP's 1/HW folded in
    # (eps scaled by HW^2) and `scale` folded into the same rsqrt multiplier.
    normp = jnp.sum(feat * feat, axis=0, keepdims=True) + float(hw * hw) * 1e-10
    s = scale_ref[0] * lax.rsqrt(normp)                                 # (1, tile_n)

    # Bias-free classifier, feature-major: (Kpad, F) @ (F, tile_n); single
    # lane-dense slab store.
    out_ref[...] = jnp.dot(wcls_ref[...], feat * s,
                           preferred_element_type=jnp.float32)


def imprint_jigsaw_forward(x_nchw, w_conv, w_cls, scale):
    """x_nchw: (N, C, H, W) float32. Returns logits (N, num_class)."""
    N, C, H, W = x_nchw.shape
    HW = H * W
    F = w_conv.shape[1]
    K = w_cls.shape[0]

    # ---- batch tiling: pad N to a sublane-friendly size; cap the tile at 256
    # rows so per-step VMEM stays comfortably under every generation's default
    # scoped limit while still amortizing the per-grid-step fixed cost.
    n8 = ((N + 7) // 8) * 8
    tile_n = min(256, n8)
    n_pad = max(-(-N // tile_n) * tile_n, n8)
    grid = (n_pad // tile_n,)

    # lane-dense classifier output: pad K to a multiple of 128, slice after.
    kp = -(-K // 128) * 128

    # x layout: (C, N_pad*HW), lanes ordered sample-major / HW-minor.
    # TODO(synk): this transpose is a one-off HBM relayout done by XLA outside
    #             the kernel; a real pipeline should hand x over already in
    #             (C, N, HW) layout so the kernel input is relayout-free.
    x_c = jnp.transpose(x_nchw, (1, 0, 2, 3)).reshape(C, N, HW)
    if n_pad != N:
        x_c = jnp.pad(x_c, ((0, 0), (0, n_pad - N), (0, 0)))
    x2d = x_c.reshape(C, n_pad * HW)

    w_conv_t = jnp.transpose(w_conv).astype(jnp.float32)                # (F, C)
    w_cls_pad = jnp.zeros((kp, F), jnp.float32).at[:K, :].set(w_cls)    # (Kpad, F)
    scale_arr = jnp.reshape(scale, (1,)).astype(jnp.float32)

    # per-chunk pooling matrix (block-diagonal ones), built once on the host
    # side of the trace; ch=8 always divides tile_n (tile_n is a multiple of 8).
    ch = 8
    lc = ch * HW
    pool = (jnp.arange(lc)[:, None] // HW == jnp.arange(ch)[None, :]
            ).astype(jnp.float32)                                       # (lc, ch)

    logits_t = pl.pallas_call(
        imprint_jigsaw_kernel,
        out_shape=jax.ShapeDtypeStruct((kp, n_pad), jnp.float32),
        grid_spec=pltpu.PrefetchScalarGridSpec(
            num_scalar_prefetch=0,
            grid=grid,
            in_specs=[
                pl.BlockSpec(memory_space=pltpu.MemorySpace.SMEM),      # scale
                pl.BlockSpec((C, tile_n * HW), lambda i: (0, i)),       # x
                pl.BlockSpec((F, C), lambda i: (0, 0)),                 # W_conv^T
                pl.BlockSpec((kp, F), lambda i: (0, 0)),                # W_cls (pad)
                pl.BlockSpec((lc, ch), lambda i: (0, 0)),               # pool
            ],
            out_specs=pl.BlockSpec((kp, tile_n), lambda i: (0, i)),
            scratch_shapes=[pltpu.VMEM((F, tile_n), jnp.float32)],
        ),
        compiler_params=pltpu.CompilerParams(
            dimension_semantics=("parallel",)),
    )(scale_arr, x2d, w_conv_t, w_cls_pad, pool)

    # drop padding; tiny (K, N) -> (N, K) transpose in the wrapper.
    return jnp.transpose(logits_t[:K, :N])


def ref_forward(x_nchw, w_conv, w_cls, scale):
    """Plain-JAX reference (same math) for a correctness check."""
    N, C, H, W = x_nchw.shape
    x = jnp.transpose(x_nchw, (0, 2, 3, 1)).reshape(N, H * W, C)
    feat = jnp.maximum(jnp.einsum("npc,cf->npf", x, w_conv), 0.0).mean(axis=1)
    norm = jnp.sqrt(jnp.sum(feat * feat, axis=1, keepdims=True) + 1e-10)
    out = scale * (feat / norm)
    return out @ w_cls.T


if __name__ == "__main__":
    # small shapes consistent with the module's forward
    N, C, H, W = 2, 4, 16, 16
    FEATURE_DIM = 32
    NUM_CLASS = 8

    key = jax.random.PRNGKey(0)
    k_x, k_conv, k_cls = jax.random.split(key, 3)

    x = jax.random.normal(k_x, (N, C, H, W), dtype=jnp.float32)
    # deterministic synthetic parameters (shapes follow the module __init__)
    w_conv = 0.1 * jax.random.normal(k_conv, (C, FEATURE_DIM), dtype=jnp.float32)
    w_cls = 0.1 * jax.random.normal(k_cls, (NUM_CLASS, FEATURE_DIM), dtype=jnp.float32)
    scale = jnp.float32(10.0)     # nn.Parameter(torch.FloatTensor([10]))

    logits = imprint_jigsaw_forward(x, w_conv, w_cls, scale)
    logits = jax.block_until_ready(logits)

    expected = ref_forward(x, w_conv, w_cls, scale)
    assert logits.shape == (N, NUM_CLASS)
    assert jnp.allclose(logits, expected, atol=1e-3, rtol=1e-3), (
        "mismatch vs reference")

    print("KERNEL_OK")
</pallas_src>

<mosaic_0001>
module attributes {stable_mosaic.version = 11 : i64} {
  func.func @imprint_jigsaw_kernel(%arg0: i32, %arg1: memref<1xf32, #tpu.memory_space<smem>>, %arg2: memref<4x2048xf32, #tpu.memory_space<vmem>>, %arg3: memref<32x4xf32, #tpu.memory_space<vmem>>, %arg4: memref<128x32xf32, #tpu.memory_space<vmem>>, %arg5: memref<2048x8xf32, #tpu.memory_space<vmem>>, %arg6: memref<128x8xf32, #tpu.memory_space<vmem>>, %arg7: memref<32x8xf32, #tpu.memory_space<vmem>>) attributes {dimension_semantics = [#tpu.dimension_semantics<parallel>], iteration_bounds = array<i64: 1>, scalar_prefetch = 0 : i64, scratch_operands = 1 : i64, tpu.core_type = #tpu.core_type<tc>, window_params = [{transform_indices = @transform_0, window_bounds = array<i64: 1>}, {transform_indices = @transform_1, window_bounds = array<i64: 4, 2048>}, {pipeline_mode = #tpu.pipeline_mode<synchronous>, transform_indices = @transform_2, window_bounds = array<i64: 32, 4>}, {pipeline_mode = #tpu.pipeline_mode<synchronous>, transform_indices = @transform_3, window_bounds = array<i64: 128, 32>}, {pipeline_mode = #tpu.pipeline_mode<synchronous>, transform_indices = @transform_4, window_bounds = array<i64: 2048, 8>}, {transform_indices = @transform_5, window_bounds = array<i64: 128, 8>}]} {
    %c0 = arith.constant 0 : index
    %c0_0 = arith.constant 0 : index
    %0 = vector.load %arg3[%c0, %c0_0] : memref<32x4xf32, #tpu.memory_space<vmem>>, vector<32x4xf32>
    %c0_1 = arith.constant 0 : index
    %c0_2 = arith.constant 0 : index
    %1 = vector.load %arg5[%c0_1, %c0_2] : memref<2048x8xf32, #tpu.memory_space<vmem>>, vector<2048x8xf32>
    %c0_3 = arith.constant 0 : index
    %c0_4 = arith.constant 0 : index
    %2 = vector.load %arg2[%c0_3, %c0_4] : memref<4x2048xf32, #tpu.memory_space<vmem>>, vector<4x2048xf32>
    %cst = arith.constant dense<0.000000e+00> : vector<32x2048xf32>
    %3 = tpu.matmul %0, %2, %cst {dimension_numbers = #tpu.dot_dimension_numbers<[1], [0], [0], [1], [0, 0, 1, 1], [], []>} : vector<32x4xf32>, vector<4x2048xf32>, vector<32x2048xf32> -> vector<32x2048xf32>
    %cst_5 = arith.constant 0.000000e+00 : f32
    %4 = vector.broadcast %cst_5 : f32 to vector<32x2048xf32>
    %5 = arith.maximumf %3, %4 : vector<32x2048xf32>
    %cst_6 = arith.constant dense<0.000000e+00> : vector<32x8xf32>
    %6 = tpu.matmul %5, %1, %cst_6 {dimension_numbers = #tpu.dot_dimension_numbers<[1], [0], [0], [1], [0, 0, 1, 1], [], []>} : vector<32x2048xf32>, vector<2048x8xf32>, vector<32x8xf32> -> vector<32x8xf32>
    %c0_7 = arith.constant 0 : index
    %c0_8 = arith.constant 0 : index
    %7 = vector.load %arg7[%c0_7, %c0_8] : memref<32x8xf32, #tpu.memory_space<vmem>>, vector<32x8xf32>
    tpu.vector_store %arg7[%c0_7, %c0_8], %6 {strides = array<i32>} : memref<32x8xf32, #tpu.memory_space<vmem>>, vector<32x8xf32>,
    %c0_9 = arith.constant 0 : index
    %c0_10 = arith.constant 0 : index
    %8 = vector.load %arg7[%c0_9, %c0_10] : memref<32x8xf32, #tpu.memory_space<vmem>>, vector<32x8xf32>
    %9 = arith.mulf %8, %8 : vector<32x8xf32>
    %cst_11 = arith.constant dense<0.000000e+00> : vector<8xf32>
    %10 = vector.multi_reduction <add>, %9, %cst_11 [0] : vector<32x8xf32> to vector<8xf32>
    %11 = vector.shape_cast %10 : vector<8xf32> to vector<1x8xf32>
    %cst_12 = arith.constant 6.553600e-06 : f32
    %12 = vector.broadcast %cst_12 : f32 to vector<1x8xf32>
    %13 = arith.addf %11, %12 : vector<1x8xf32>
    %c0_13 = arith.constant 0 : index
    %14 = memref.load %arg1[%c0_13] : memref<1xf32, #tpu.memory_space<smem>>
    %15 = math.rsqrt %13 : vector<1x8xf32>
    %16 = vector.broadcast %14 : f32 to vector<1x8xf32>
    %17 = arith.mulf %16, %15 : vector<1x8xf32>
    %c0_14 = arith.constant 0 : index
    %c0_15 = arith.constant 0 : index
    %18 = vector.load %arg4[%c0_14, %c0_15] : memref<128x32xf32, #tpu.memory_space<vmem>>, vector<128x32xf32>
    %19 = vector.broadcast %17 : vector<1x8xf32> to vector<32x8xf32>
    %20 = arith.mulf %8, %19 : vector<32x8xf32>
    %cst_16 = arith.constant dense<0.000000e+00> : vector<128x8xf32>
    %21 = tpu.matmul %18, %20, %cst_16 {dimension_numbers = #tpu.dot_dimension_numbers<[1], [0], [0], [1], [0, 0, 1, 1], [], []>} : vector<128x32xf32>, vector<32x8xf32>, vector<128x8xf32> -> vector<128x8xf32>
    %c0_17 = arith.constant 0 : index
    %c0_18 = arith.constant 0 : index
    %22 = vector.load %arg6[%c0_17, %c0_18] : memref<128x8xf32, #tpu.memory_space<vmem>>, vector<128x8xf32>
    tpu.vector_store %arg6[%c0_17, %c0_18], %21 {strides = array<i32>} : memref<128x8xf32, #tpu.memory_space<vmem>>, vector<128x8xf32>,
    return
  }
  func.func @transform_0(%arg0: i32) -> i32 {
    %c0_i32 = arith.constant 0 : i32
    %c0_i32_0 = arith.constant 0 : i32
    return %c0_i32 : i32
  }
  func.func @transform_1(%arg0: i32) -> (i32, i32) {
    %c0_i32 = arith.constant 0 : i32
    %c0_i32_0 = arith.constant 0 : i32
    return %c0_i32, %arg0 : i32, i32
  }
  func.func @transform_2(%arg0: i32) -> (i32, i32) {
    %c0_i32 = arith.constant 0 : i32
    %c0_i32_0 = arith.constant 0 : i32
    %c0_i32_1 = arith.constant 0 : i32
    return %c0_i32, %c0_i32_0 : i32, i32
  }
  func.func @transform_3(%arg0: i32) -> (i32, i32) {
    %c0_i32 = arith.constant 0 : i32
    %c0_i32_0 = arith.constant 0 : i32
    %c0_i32_1 = arith.constant 0 : i32
    return %c0_i32, %c0_i32_0 : i32, i32
  }
  func.func @transform_4(%arg0: i32) -> (i32, i32) {
    %c0_i32 = arith.constant 0 : i32
    %c0_i32_0 = arith.constant 0 : i32
    %c0_i32_1 = arith.constant 0 : i32
    return %c0_i32, %c0_i32_0 : i32, i32
  }
  func.func @transform_5(%arg0: i32) -> (i32, i32) {
    %c0_i32 = arith.constant 0 : i32
    %c0_i32_0 = arith.constant 0 : i32
    return %c0_i32, %arg0 : i32, i32
  }
}

</mosaic_0001>

<llo_original>
// kernel: tpu_custom_call.1
$region0: #{tpu_custom_call.1}
  #allocation0 [shape = 'u32[]', space=smem, size = 0x4, offset = 0x4, fixed_abs, tag = 'smem constant byte address 0x4 - core index']
  #allocation1 [shape = 'u32[72,128]{1,0:T(1,128)}', space=vmem, size = 0x9000, scoped, tag = 'internal scratch']
  #allocation2 [shape = 'f32[32,8]{1,0:T(8,128)}', space=vmem, size = 0x4000, scoped, tag = 'scratch operand']
  #allocation3 [shape = 'f32[1]{0:T(128)S(6)}', space=smem, size = 0x200, scoped, tag = 'scoped memory for tpu_custom_call.1']
  %s0 = inlined_call_operand.<no memory space> [shape: f32[1], index: 0, kind: input, shape index: {}]
  %s1 = inlined_call_operand.vmem [shape: f32[4,2048], index: 1, kind: input, shape index: {}]
  %s2 = inlined_call_operand.vmem [shape: f32[32,4], index: 2, kind: input, shape index: {}]
  %s3 = inlined_call_operand.vmem [shape: f32[128,32], index: 3, kind: input, shape index: {}]
  %s4 = inlined_call_operand.vmem [shape: f32[2048,8], index: 4, kind: input, shape index: {}]
  %s5 = inlined_call_operand.vmem [shape: f32[128,8], index: 5, kind: output, shape index: {}]
  %s6 = sld [smem:[#allocation0]]
  $region30: #{tpu_custom_call.1} parent=0
    _
  %s8 = ssub.s32 1, %s6
  %s9 = scalar_select 0, %s8, %s6
  %10 = sst [smem:[#allocation3]] %s0
  // Predicated region
  $region2: #{tpu_custom_call.1} parent=0 // pred_check
    _
  $region3: #{tpu_custom_call.1} parent=0 // pred_check_branch
    %12 = sbr.rel (0) target = $region5
  $region4: #{tpu_custom_call.1} parent=0 // pred_region
    _
  $region5: #{tpu_custom_call.1} parent=0 // pred_fallthru
    _
  // Predicated region
  $region6: #{tpu_custom_call.1} parent=0 // pred_check
    _
  $region7: #{tpu_custom_call.1} parent=0 // pred_check_branch
    %14 = sbr.rel (0) target = $region9
  $region8: #{tpu_custom_call.1} parent=0 // pred_region
    _
  $region9: #{tpu_custom_call.1} parent=0 // pred_fallthru
    _
  // Predicated region
  $region10: #{tpu_custom_call.1} parent=0 // pred_check
    _
  $region11: #{tpu_custom_call.1} parent=0 // pred_check_branch
    %16 = sbr.rel (0) target = $region13
  $region12: #{tpu_custom_call.1} parent=0 // pred_region
    _
  $region13: #{tpu_custom_call.1} parent=0 // pred_fallthru
    _
  // Predicated region
  $region14: #{tpu_custom_call.1} parent=0 // pred_check
    _
  $region15: #{tpu_custom_call.1} parent=0 // pred_check_branch
    %18 = sbr.rel (0) target = $region17
  $region16: #{tpu_custom_call.1} parent=0 // pred_region
    _
  $region17: #{tpu_custom_call.1} parent=0 // pred_fallthru
    _
  // Predicated region
  $region18: #{tpu_custom_call.1} parent=0 // pred_check
    _
  $region19: #{tpu_custom_call.1} parent=0 // pred_check_branch
    %20 = sbr.rel (0) target = $region21
  $region20: #{tpu_custom_call.1} parent=0 // pred_region
    _
  $region21: #{tpu_custom_call.1} parent=0 // pred_fallthru
    _
  %v21 = vld [vmem:[%s2] sm:$0xff]
  %v22 = vld [vmem:[%s2 + $0x8] sm:$0xff]
  %v23 = vld [vmem:[%s2 + $0x10] sm:$0xff]
  %v24 = vld [vmem:[%s2 + $0x18] sm:$0xff]
  %v25 = vld [vmem:[%s4] sm:$0xff]
  %v26 = vld [vmem:[%s4 + $0x8] sm:$0xff]
  %v27 = vld [vmem:[%s4 + $0x10] sm:$0xff]
  %v28 = vld [vmem:[%s4 + $0x18] sm:$0xff]
  %v29 = vld [vmem:[%s4 + $0x20] sm:$0xff]
  %v30 = vld [vmem:[%s4 + $0x28] sm:$0xff]
  %v31 = vld [vmem:[%s4 + $0x30] sm:$0xff]
  %v32 = vld [vmem:[%s4 + $0x38] sm:$0xff]
  %v33 = vld [vmem:[%s4 + $0x40] sm:$0xff]
  %v34 = vld [vmem:[%s4 + $0x48] sm:$0xff]
  %v35 = vld [vmem:[%s4 + $0x50] sm:$0xff]
  %v36 = vld [vmem:[%s4 + $0x58] sm:$0xff]
  %v37 = vld [vmem:[%s4 + $0x60] sm:$0xff]
  %v38 = vld [vmem:[%s4 + $0x68] sm:$0xff]
  %v39 = vld [vmem:[%s4 + $0x70] sm:$0xff]
  %v40 = vld [vmem:[%s4 + $0x78] sm:$0xff]
  %v41 = vld [vmem:[%s4 + $0x80] sm:$0xff]
  %v42 = vld [vmem:[%s4 + $0x88] sm:$0xff]
  %v43 = vld [vmem:[%s4 + $0x90] sm:$0xff]
  %v44 = vld [vmem:[%s4 + $0x98] sm:$0xff]
  %v45 = vld [vmem:[%s4 + $0xa0] sm:$0xff]
  %v46 = vld [vmem:[%s4 + $0xa8] sm:$0xff]
  %v47 = vld [vmem:[%s4 + $0xb0] sm:$0xff]
  %v48 = vld [vmem:[%s4 + $0xb8] sm:$0xff]
  %v49 = vld [vmem:[%s4 + $0xc0] sm:$0xff]
  %v50 = vld [vmem:[%s4 + $0xc8] sm:$0xff]
  %v51 = vld [vmem:[%s4 + $0xd0] sm:$0xff]
  %v52 = vld [vmem:[%s4 + $0xd8] sm:$0xff]
  %v53 = vld [vmem:[%s4 + $0xe0] sm:$0xff]
  %v54 = vld [vmem:[%s4 + $0xe8] sm:$0xff]
  %v55 = vld [vmem:[%s4 + $0xf0] sm:$0xff]
  %v56 = vld [vmem:[%s4 + $0xf8] sm:$0xff]
  %v57 = vld [vmem:[%s4 + $0x100] sm:$0xff]
  %v58 = vld [vmem:[%s4 + $0x108] sm:$0xff]
  %v59 = vld [vmem:[%s4 + $0x110] sm:$0xff]
  %v60 = vld [vmem:[%s4 + $0x118] sm:$0xff]
  %v61 = vld [vmem:[%s4 + $0x120] sm:$0xff]
  %v62 = vld [vmem:[%s4 + $0x128] sm:$0xff]
  %v63 = vld [vmem:[%s4 + $0x130] sm:$0xff]
  %v64 = vld [vmem:[%s4 + $0x138] sm:$0xff]
  %v65 = vld [vmem:[%s4 + $0x140] sm:$0xff]
  %v66 = vld [vmem:[%s4 + $0x148] sm:$0xff]
  %v67 = vld [vmem:[%s4 + $0x150] sm:$0xff]
  %v68 = vld [vmem:[%s4 + $0x158] sm:$0xff]
  %v69 = vld [vmem:[%s4 + $0x160] sm:$0xff]
  %v70 = vld [vmem:[%s4 + $0x168] sm:$0xff]
  %v71 = vld [vmem:[%s4 + $0x170] sm:$0xff]
  %v72 = vld [vmem:[%s4 + $0x178] sm:$0xff]
  %v73 = vld [vmem:[%s4 + $0x180] sm:$0xff]
  %v74 = vld [vmem:[%s4 + $0x188] sm:$0xff]
  %v75 = vld [vmem:[%s4 + $0x190] sm:$0xff]
  %v76 = vld [vmem:[%s4 + $0x198] sm:$0xff]
  %v77 = vld [vmem:[%s4 + $0x1a0] sm:$0xff]
  %v78 = vld [vmem:[%s4 + $0x1a8] sm:$0xff]
  %v79 = vld [vmem:[%s4 + $0x1b0] sm:$0xff]
  %v80 = vld [vmem:[%s4 + $0x1b8] sm:$0xff]
  %v81 = vld [vmem:[%s4 + $0x1c0] sm:$0xff]
  %v82 = vld [vmem:[%s4 + $0x1c8] sm:$0xff]
  %v83 = vld [vmem:[%s4 + $0x1d0] sm:$0xff]
  %v84 = vld [vmem:[%s4 + $0x1d8] sm:$0xff]
  %v85 = vld [vmem:[%s4 + $0x1e0] sm:$0xff]
  %v86 = vld [vmem:[%s4 + $0x1e8] sm:$0xff]
  %v87 = vld [vmem:[%s4 + $0x1f0] sm:$0xff]
  %v88 = vld [vmem:[%s4 + $0x1f8] sm:$0xff]
  %v89 = vld [vmem:[%s4 + $0x200] sm:$0xff]
  %v90 = vld [vmem:[%s4 + $0x208] sm:$0xff]
  %v91 = vld [vmem:[%s4 + $0x210] sm:$0xff]
  %v92 = vld [vmem:[%s4 + $0x218] sm:$0xff]
  %v93 = vld [vmem:[%s4 + $0x220] sm:$0xff]
  %v94 = vld [vmem:[%s4 + $0x228] sm:$0xff]
  %v95 = vld [vmem:[%s4 + $0x230] sm:$0xff]
  %v96 = vld [vmem:[%s4 + $0x238] sm:$0xff]
  %v97 = vld [vmem:[%s4 + $0x240] sm:$0xff]
  %v98 = vld [vmem:[%s4 + $0x248] sm:$0xff]
  %v99 = vld [vmem:[%s4 + $0x250] sm:$0xff]
  %v100 = vld [vmem:[%s4 + $0x258] sm:$0xff]
  %v101 = vld [vmem:[%s4 + $0x260] sm:$0xff]
  %v102 = vld [vmem:[%s4 + $0x268] sm:$0xff]
  %v103 = vld [vmem:[%s4 + $0x270] sm:$0xff]
  %v104 = vld [vmem:[%s4 + $0x278] sm:$0xff]
  %v105 = vld [vmem:[%s4 + $0x280] sm:$0xff]
  %v106 = vld [vmem:[%s4 + $0x288] sm:$0xff]
  %v107 = vld [vmem:[%s4 + $0x290] sm:$0xff]
  %v108 = vld [vmem:[%s4 + $0x298] sm:$0xff]
  %v109 = vld [vmem:[%s4 + $0x2a0] sm:$0xff]
  %v110 = vld [vmem:[%s4 + $0x2a8] sm:$0xff]
  %v111 = vld [vmem:[%s4 + $0x2b0] sm:$0xff]
  %v112 = vld [vmem:[%s4 + $0x2b8] sm:$0xff]
  %v113 = vld [vmem:[%s4 + $0x2c0] sm:$0xff]
  %v114 = vld [vmem:[%s4 + $0x2c8] sm:$0xff]
  %v115 = vld [vmem:[%s4 + $0x2d0] sm:$0xff]
  %v116 = vld [vmem:[%s4 + $0x2d8] sm:$0xff]
  %v117 = vld [vmem:[%s4 + $0x2e0] sm:$0xff]
  %v118 = vld [vmem:[%s4 + $0x2e8] sm:$0xff]
  %v119 = vld [vmem:[%s4 + $0x2f0] sm:$0xff]
  %v120 = vld [vmem:[%s4 + $0x2f8] sm:$0xff]
  %v121 = vld [vmem:[%s4 + $0x300] sm:$0xff]
  %v122 = vld [vmem:[%s4 + $0x308] sm:$0xff]
  %v123 = vld [vmem:[%s4 + $0x310] sm:$0xff]
  %v124 = vld [vmem:[%s4 + $0x318] sm:$0xff]
  %v125 = vld [vmem:[%s4 + $0x320] sm:$0xff]
  %v126 = vld [vmem:[%s4 + $0x328] sm:$0xff]
  %v127 = vld [vmem:[%s4 + $0x330] sm:$0xff]
  %v128 = vld [vmem:[%s4 + $0x338] sm:$0xff]
  %v129 = vld [vmem:[%s4 + $0x340] sm:$0xff]
  %v130 = vld [vmem:[%s4 + $0x348] sm:$0xff]
  %v131 = vld [vmem:[%s4 + $0x350] sm:$0xff]
  %v132 = vld [vmem:[%s4 + $0x358] sm:$0xff]
  %v133 = vld [vmem:[%s4 + $0x360] sm:$0xff]
  %v134 = vld [vmem:[%s4 + $0x368] sm:$0xff]
  %v135 = vld [vmem:[%s4 + $0x370] sm:$0xff]
  %v136 = vld [vmem:[%s4 + $0x378] sm:$0xff]
  %v137 = vld [vmem:[%s4 + $0x380] sm:$0xff]
  %v138 = vld [vmem:[%s4 + $0x388] sm:$0xff]
  %v139 = vld [vmem:[%s4 + $0x390] sm:$0xff]
  %v140 = vld [vmem:[%s4 + $0x398] sm:$0xff]
  %v141 = vld [vmem:[%s4 + $0x3a0] sm:$0xff]
  %v142 = vld [vmem:[%s4 + $0x3a8] sm:$0xff]
  %v143 = vld [vmem:[%s4 + $0x3b0] sm:$0xff]
  %v144 = vld [vmem:[%s4 + $0x3b8] sm:$0xff]
  %v145 = vld [vmem:[%s4 + $0x3c0] sm:$0xff]
  %v146 = vld [vmem:[%s4 + $0x3c8] sm:$0xff]
  %v147 = vld [vmem:[%s4 + $0x3d0] sm:$0xff]
  %v148 = vld [vmem:[%s4 + $0x3d8] sm:$0xff]
  %v149 = vld [vmem:[%s4 + $0x3e0] sm:$0xff]
  %v150 = vld [vmem:[%s4 + $0x3e8] sm:$0xff]
  %v151 = vld [vmem:[%s4 + $0x3f0] sm:$0xff]
  %v152 = vld [vmem:[%s4 + $0x3f8] sm:$0xff]
  %v153 = vld [vmem:[%s4 + $0x400] sm:$0xff]
  %v154 = vld [vmem:[%s4 + $0x408] sm:$0xff]
  %v155 = vld [vmem:[%s4 + $0x410] sm:$0xff]
  %v156 = vld [vmem:[%s4 + $0x418] sm:$0xff]
  %v157 = vld [vmem:[%s4 + $0x420] sm:$0xff]
  %v158 = vld [vmem:[%s4 + $0x428] sm:$0xff]
  %v159 = vld [vmem:[%s4 + $0x430] sm:$0xff]
  %v160 = vld [vmem:[%s4 + $0x438] sm:$0xff]
  %v161 = vld [vmem:[%s4 + $0x440] sm:$0xff]
  %v162 = vld [vmem:[%s4 + $0x448] sm:$0xff]
  %v163 = vld [vmem:[%s4 + $0x450] sm:$0xff]
  %v164 = vld [vmem:[%s4 + $0x458] sm:$0xff]
  %v165 = vld [vmem:[%s4 + $0x460] sm:$0xff]
  %v166 = vld [vmem:[%s4 + $0x468] sm:$0xff]
  %v167 = vld [vmem:[%s4 + $0x470] sm:$0xff]
  %v168 = vld [vmem:[%s4 + $0x478] sm:$0xff]
  %v169 = vld [vmem:[%s4 + $0x480] sm:$0xff]
  %v170 = vld [vmem:[%s4 + $0x488] sm:$0xff]
  %v171 = vld [vmem:[%s4 + $0x490] sm:$0xff]
  %v172 = vld [vmem:[%s4 + $0x498] sm:$0xff]
  %v173 = vld [vmem:[%s4 + $0x4a0] sm:$0xff]
  %v174 = vld [vmem:[%s4 + $0x4a8] sm:$0xff]
  %v175 = vld [vmem:[%s4 + $0x4b0] sm:$0xff]
  %v176 = vld [vmem:[%s4 + $0x4b8] sm:$0xff]
  %v177 = vld [vmem:[%s4 + $0x4c0] sm:$0xff]
  %v178 = vld [vmem:[%s4 + $0x4c8] sm:$0xff]
  %v179 = vld [vmem:[%s4 + $0x4d0] sm:$0xff]
  %v180 = vld [vmem:[%s4 + $0x4d8] sm:$0xff]
  %v181 = vld [vmem:[%s4 + $0x4e0] sm:$0xff]
  %v182 = vld [vmem:[%s4 + $0x4e8] sm:$0xff]
  %v183 = vld [vmem:[%s4 + $0x4f0] sm:$0xff]
  %v184 = vld [vmem:[%s4 + $0x4f8] sm:$0xff]
  %v185 = vld [vmem:[%s4 + $0x500] sm:$0xff]
  %v186 = vld [vmem:[%s4 + $0x508] sm:$0xff]
  %v187 = vld [vmem:[%s4 + $0x510] sm:$0xff]
  %v188 = vld [vmem:[%s4 + $0x518] sm:$0xff]
  %v189 = vld [vmem:[%s4 + $0x520] sm:$0xff]
  %v190 = vld [vmem:[%s4 + $0x528] sm:$0xff]
  %v191 = vld [vmem:[%s4 + $0x530] sm:$0xff]
  %v192 = vld [vmem:[%s4 + $0x538] sm:$0xff]
  %v193 = vld [vmem:[%s4 + $0x540] sm:$0xff]
  %v194 = vld [vmem:[%s4 + $0x548] sm:$0xff]
  %v195 = vld [vmem:[%s4 + $0x550] sm:$0xff]
  %v196 = vld [vmem:[%s4 + $0x558] sm:$0xff]
  %v197 = vld [vmem:[%s4 + $0x560] sm:$0xff]
  %v198 = vld [vmem:[%s4 + $0x568] sm:$0xff]
  %v199 = vld [vmem:[%s4 + $0x570] sm:$0xff]
  %v200 = vld [vmem:[%s4 + $0x578] sm:$0xff]
  %v201 = vld [vmem:[%s4 + $0x580] sm:$0xff]
  %v202 = vld [vmem:[%s4 + $0x588] sm:$0xff]
  %v203 = vld [vmem:[%s4 + $0x590] sm:$0xff]
  %v204 = vld [vmem:[%s4 + $0x598] sm:$0xff]
  %v205 = vld [vmem:[%s4 + $0x5a0] sm:$0xff]
  %v206 = vld [vmem:[%s4 + $0x5a8] sm:$0xff]
  %v207 = vld [vmem:[%s4 + $0x5b0] sm:$0xff]
  %v208 = vld [vmem:[%s4 + $0x5b8] sm:$0xff]
  %v209 = vld [vmem:[%s4 + $0x5c0] sm:$0xff]
  %v210 = vld [vmem:[%s4 + $0x5c8] sm:$0xff]
  %v211 = vld [vmem:[%s4 + $0x5d0] sm:$0xff]
  %v212 = vld [vmem:[%s4 + $0x5d8] sm:$0xff]
  %v213 = vld [vmem:[%s4 + $0x5e0] sm:$0xff]
  %v214 = vld [vmem:[%s4 + $0x5e8] sm:$0xff]
  %v215 = vld [vmem:[%s4 + $0x5f0] sm:$0xff]
  %v216 = vld [vmem:[%s4 + $0x5f8] sm:$0xff]
  %v217 = vld [vmem:[%s4 + $0x600] sm:$0xff]
  %v218 = vld [vmem:[%s4 + $0x608] sm:$0xff]
  %v219 = vld [vmem:[%s4 + $0x610] sm:$0xff]
  %v220 = vld [vmem:[%s4 + $0x618] sm:$0xff]
  %v221 = vld [vmem:[%s4 + $0x620] sm:$0xff]
  %v222 = vld [vmem:[%s4 + $0x628] sm:$0xff]
  %v223 = vld [vmem:[%s4 + $0x630] sm:$0xff]
  %v224 = vld [vmem:[%s4 + $0x638] sm:$0xff]
  %v225 = vld [vmem:[%s4 + $0x640] sm:$0xff]
  %v226 = vld [vmem:[%s4 + $0x648] sm:$0xff]
  %v227 = vld [vmem:[%s4 + $0x650] sm:$0xff]
  %v228 = vld [vmem:[%s4 + $0x658] sm:$0xff]
  %v229 = vld [vmem:[%s4 + $0x660] sm:$0xff]
  %v230 = vld [vmem:[%s4 + $0x668] sm:$0xff]
  %v231 = vld [vmem:[%s4 + $0x670] sm:$0xff]
  %v232 = vld [vmem:[%s4 + $0x678] sm:$0xff]
  %v233 = vld [vmem:[%s4 + $0x680] sm:$0xff]
  %v234 = vld [vmem:[%s4 + $0x688] sm:$0xff]
  %v235 = vld [vmem:[%s4 + $0x690] sm:$0xff]
  %v236 = vld [vmem:[%s4 + $0x698] sm:$0xff]
  %v237 = vld [vmem:[%s4 + $0x6a0] sm:$0xff]
  %v238 = vld [vmem:[%s4 + $0x6a8] sm:$0xff]
  %v239 = vld [vmem:[%s4 + $0x6b0] sm:$0xff]
  %v240 = vld [vmem:[%s4 + $0x6b8] sm:$0xff]
  %v241 = vld [vmem:[%s4 + $0x6c0] sm:$0xff]
  %v242 = vld [vmem:[%s4 + $0x6c8] sm:$0xff]
  %v243 = vld [vmem:[%s4 + $0x6d0] sm:$0xff]
  %v244 = vld [vmem:[%s4 + $0x6d8] sm:$0xff]
  %v245 = vld [vmem:[%s4 + $0x6e0] sm:$0xff]
  %v246 = vld [vmem:[%s4 + $0x6e8] sm:$0xff]
  %v247 = vld [vmem:[%s4 + $0x6f0] sm:$0xff]
  %v248 = vld [vmem:[%s4 + $0x6f8] sm:$0xff]
  %v249 = vld [vmem:[%s4 + $0x700] sm:$0xff]
  %v250 = vld [vmem:[%s4 + $0x708] sm:$0xff]
  %v251 = vld [vmem:[%s4 + $0x710] sm:$0xff]
  %v252 = vld [vmem:[%s4 + $0x718] sm:$0xff]
  %v253 = vld [vmem:[%s4 + $0x720] sm:$0xff]
  %v254 = vld [vmem:[%s4 + $0x728] sm:$0xff]
  %v255 = vld [vmem:[%s4 + $0x730] sm:$0xff]
  %v256 = vld [vmem:[%s4 + $0x738] sm:$0xff]
  %v257 = vld [vmem:[%s4 + $0x740] sm:$0xff]
  %v258 = vld [vmem:[%s4 + $0x748] sm:$0xff]
  %v259 = vld [vmem:[%s4 + $0x750] sm:$0xff]
  %v260 = vld [vmem:[%s4 + $0x758] sm:$0xff]
  %v261 = vld [vmem:[%s4 + $0x760] sm:$0xff]
  %v262 = vld [vmem:[%s4 + $0x768] sm:$0xff]
  %v263 = vld [vmem:[%s4 + $0x770] sm:$0xff]
  %v264 = vld [vmem:[%s4 + $0x778] sm:$0xff]
  %v265 = vld [vmem:[%s4 + $0x780] sm:$0xff]
  %v266 = vld [vmem:[%s4 + $0x788] sm:$0xff]
  %v267 = vld [vmem:[%s4 + $0x790] sm:$0xff]
  %v268 = vld [vmem:[%s4 + $0x798] sm:$0xff]
  %v269 = vld [vmem:[%s4 + $0x7a0] sm:$0xff]
  %v270 = vld [vmem:[%s4 + $0x7a8] sm:$0xff]
  %v271 = vld [vmem:[%s4 + $0x7b0] sm:$0xff]
  %v272 = vld [vmem:[%s4 + $0x7b8] sm:$0xff]
  %v273 = vld [vmem:[%s4 + $0x7c0] sm:$0xff]
  %v274 = vld [vmem:[%s4 + $0x7c8] sm:$0xff]
  %v275 = vld [vmem:[%s4 + $0x7d0] sm:$0xff]
  %v276 = vld [vmem:[%s4 + $0x7d8] sm:$0xff]
  %v277 = vld [vmem:[%s4 + $0x7e0] sm:$0xff]
  %v278 = vld [vmem:[%s4 + $0x7e8] sm:$0xff]
  %v279 = vld [vmem:[%s4 + $0x7f0] sm:$0xff]
  %v280 = vld [vmem:[%s4 + $0x7f8] sm:$0xff]
  %v281 = vld [vmem:[%s1] sm:$0xff]
  %v282 = vld [vmem:[%s1 + $0x8] sm:$0xff]
  %v283 = vld [vmem:[%s1 + $0x10] sm:$0xff]
  %v284 = vld [vmem:[%s1 + $0x18] sm:$0xff]
  %v285 = vld [vmem:[%s1 + $0x20] sm:$0xff]
  %v286 = vld [vmem:[%s1 + $0x28] sm:$0xff]
  %v287 = vld [vmem:[%s1 + $0x30] sm:$0xff]
  %v288 = vld [vmem:[%s1 + $0x38] sm:$0xff]
  %297 = vst [vmem:[#allocation1] ss:$2 sm:$0xff] %v281
  %s298 = scalar_lea.vmem [#allocation1], 16
  %299 = vst [vmem:[%s298] ss:$2 sm:$0xff] %v282
  %s300 = scalar_lea.vmem [#allocation1], 32
  %301 = vst [vmem:[%s300] ss:$2 sm:$0xff] %v283
  %s302 = scalar_lea.vmem [#allocation1], 48
  %303 = vst [vmem:[%s302] ss:$2 sm:$0xff] %v284
  %v304 = vld.sshfl [vmem:[#allocation1] sm:$0xff pattern:$0x75316420]
  %v305 = vld.sshfl [vmem:[#allocation1 + $0x8] sm:$0xff pattern:$0x75316420]
  %v306 = vld.sshfl [vmem:[#allocation1 + $0x10] sm:$0xff pattern:$0x75316420]
  %v307 = vld.sshfl [vmem:[#allocation1 + $0x18] sm:$0xff pattern:$0x75316420]
  %v308 = vld.sshfl [vmem:[#allocation1 + $0x20] sm:$0xff pattern:$0x75316420]
  %v309 = vld.sshfl [vmem:[#allocation1 + $0x28] sm:$0xff pattern:$0x75316420]
  %v310 = vld.sshfl [vmem:[#allocation1 + $0x30] sm:$0xff pattern:$0x75316420]
  %v311 = vld.sshfl [vmem:[#allocation1 + $0x38] sm:$0xff pattern:$0x75316420]
  %312 = vst [vmem:[#allocation1] ss:$2 sm:$0xff] %v285
  %313 = vst [vmem:[%s298] ss:$2 sm:$0xff] %v286
  %314 = vst [vmem:[%s300] ss:$2 sm:$0xff] %v287
  %315 = vst [vmem:[%s302] ss:$2 sm:$0xff] %v288
  %v316 = vld.sshfl [vmem:[#allocation1] sm:$0xff pattern:$0x75316420]
  %v317 = vld.sshfl [vmem:[#allocation1 + $0x8] sm:$0xff pattern:$0x75316420]
  %v318 = vld.sshfl [vmem:[#allocation1 + $0x10] sm:$0xff pattern:$0x75316420]
  %v319 = vld.sshfl [vmem:[#allocation1 + $0x18] sm:$0xff pattern:$0x75316420]
  %v320 = vld.sshfl [vmem:[#allocation1 + $0x20] sm:$0xff pattern:$0x75316420]
  %v321 = vld.sshfl [vmem:[#allocation1 + $0x28] sm:$0xff pattern:$0x75316420]
  %v322 = vld.sshfl [vmem:[#allocation1 + $0x30] sm:$0xff pattern:$0x75316420]
  %v323 = vld.sshfl [vmem:[#allocation1 + $0x38] sm:$0xff pattern:$0x75316420]
  %vm324 = vcmask 31744
  %v326 = vsel %vm324, %v21, 0
  %v329 = vsel %vm324, %v22, 0
  %v332 = vsel %vm324, %v23, 0
  %v335 = vsel %vm324, %v24, 0
  %vm337 = vcmask 1043456
  %v338 = vsel %vm337, %v304, 0
  %v340 = vsel %vm337, %v305, 0
  %v342 = vsel %vm337, %v306, 0
  %v344 = vsel %vm337, %v307, 0
  %v346 = vsel %vm337, %v308, 0
  %v348 = vsel %vm337, %v309, 0
  %v350 = vsel %vm337, %v310, 0
  %v352 = vsel %vm337, %v311, 0
  %v354 = vsel %vm337, %v316, 0
  %v356 = vsel %vm337, %v317, 0
  %v358 = vsel %vm337, %v318, 0
  %v360 = vsel %vm337, %v319, 0
  %v362 = vsel %vm337, %v320, 0
  %v364 = vsel %vm337, %v321, 0
  %v366 = vsel %vm337, %v322, 0
  %v368 = vsel %vm337, %v323, 0
  %370 = vmatpush.msra.mxu0 0.0
  %371 = vmatpush.msra.mxu0 0.0
  %372 = vmatpush.msra.mxu0 0.0
  %373 = vmatpush.msra.mxu0 0.0
  %374 = vmatpush.msra.mxu0 0.0
  %375 = vmatpush.msra.mxu0 0.0
  %376 = vmatpush.msra.mxu0 0.0
  %377 = vmatpush.msra.mxu0 0.0
  %378 = vmatpush.msra.mxu0 0.0
  %379 = vmatpush.msra.mxu0 0.0
  %380 = vmatpush.msra.mxu0 0.0
  %381 = vmatpush.msra.mxu0 0.0
  %382 = vmatpush.msra.mxu0 0.0
  %383 = vmatpush.msra.mxu0 0.0
  %384 = vmatpush.msra.mxu0 0.0
  %385 = vmatpush.msra.mxu0 %v338
  %386 = vmatmul.f32.gmra.mxu0 %v326
  %v387 = vpop.f32.mrf.mxu0
  %v388 = vadd.f32 0.0, %v387
  %389 = vmatmul.f32.gmra.mxu0 %v329
  %v390 = vpop.f32.mrf.mxu0
  %v391 = vadd.f32 0.0, %v390
  %392 = vmatmul.f32.gmra.mxu0 %v332
  %v393 = vpop.f32.mrf.mxu0
  %v394 = vadd.f32 0.0, %v393
  %395 = vmatmul.f32.gmra.mxu0 %v335
  %v396 = vpop.f32.mrf.mxu0
  %v397 = vadd.f32 0.0, %v396
  %398 = vdwg.mxu0
  %399 = vmatpush.msra.mxu0 0.0
  %400 = vmatpush.msra.mxu0 0.0
  %401 = vmatpush.msra.mxu0 0.0
  %402 = vmatpush.msra.mxu0 0.0
  %403 = vmatpush.msra.mxu0 0.0
  %404 = vmatpush.msra.mxu0 0.0
  %405 = vmatpush.msra.mxu0 0.0
  %406 = vmatpush.msra.mxu0 0.0
  %407 = vmatpush.msra.mxu0 0.0
  %408 = vmatpush.msra.mxu0 0.0
  %409 = vmatpush.msra.mxu0 0.0
  %410 = vmatpush.msra.mxu0 0.0
  %411 = vmatpush.msra.mxu0 0.0
  %412 = vmatpush.msra.mxu0 0.0
  %413 = vmatpush.msra.mxu0 0.0
  %414 = vmatpush.msra.mxu0 %v340
  %415 = vmatmul.f32.gmra.mxu0 %v326
  %v416 = vpop.f32.mrf.mxu0
  %v417 = vadd.f32 0.0, %v416
  %418 = vmatmul.f32.gmra.mxu0 %v329
  %v419 = vpop.f32.mrf.mxu0
  %v420 = vadd.f32 0.0, %v419
  %421 = vmatmul.f32.gmra.mxu0 %v332
  %v422 = vpop.f32.mrf.mxu0
  %v423 = vadd.f32 0.0, %v422
  %424 = vmatmul.f32.gmra.mxu0 %v335
  %v425 = vpop.f32.mrf.mxu0
  %v426 = vadd.f32 0.0, %v425
  %427 = vdwg.mxu0
  %428 = vmatpush.msra.mxu0 0.0
  %429 = vmatpush.msra.mxu0 0.0
  %430 = vmatpush.msra.mxu0 0.0
  %431 = vmatpush.msra.mxu0 0.0
  %432 = vmatpush.msra.mxu0 0.0
  %433 = vmatpush.msra.mxu0 0.0
  %434 = vmatpush.msra.mxu0 0.0
  %435 = vmatpush.msra.mxu0 0.0
  %436 = vmatpush.msra.mxu0 0.0
  %437 = vmatpush.msra.mxu0 0.0
  %438 = vmatpush.msra.mxu0 0.0
  %439 = vmatpush.msra.mxu0 0.0
  %440 = vmatpush.msra.mxu0 0.0
  %441 = vmatpush.msra.mxu0 0.0
  %442 = vmatpush.msra.mxu0 0.0
  %443 = vmatpush.msra.mxu0 %v342
  %444 = vmatmul.f32.gmra.mxu0 %v326
  %v445 = vpop.f32.mrf.mxu0
  %v446 = vadd.f32 0.0, %v445
  %447 = vmatmul.f32.gmra.mxu0 %v329
  %v448 = vpop.f32.mrf.mxu0
  %v449 = vadd.f32 0.0, %v448
  %450 = vmatmul.f32.gmra.mxu0 %v332
  %v451 = vpop.f32.mrf.mxu0
  %v452 = vadd.f32 0.0, %v451
  %453 = vmatmul.f32.gmra.mxu0 %v335
  %v454 = vpop.f32.mrf.mxu0
  %v455 = vadd.f32 0.0, %v454
  %456 = vdwg.mxu0
  %457 = vmatpush.msra.mxu0 0.0
  %458 = vmatpush.msra.mxu0 0.0
  %459 = vmatpush.msra.mxu0 0.0
  %460 = vmatpush.msra.mxu0 0.0
  %461 = vmatpush.msra.mxu0 0.0
  %462 = vmatpush.msra.mxu0 0.0
  %463 = vmatpush.msra.mxu0 0.0
  %464 = vmatpush.msra.mxu0 0.0
  %465 = vmatpush.msra.mxu0 0.0
  %466 = vmatpush.msra.mxu0 0.0
  %467 = vmatpush.msra.mxu0 0.0
  %468 = vmatpush.msra.mxu0 0.0
  %469 = vmatpush.msra.mxu0 0.0
  %470 = vmatpush.msra.mxu0 0.0
  %471 = vmatpush.msra.mxu0 0.0
  %472 = vmatpush.msra.mxu0 %v344
  %473 = vmatmul.f32.gmra.mxu0 %v326
  %v474 = vpop.f32.mrf.mxu0
  %v475 = vadd.f32 0.0, %v474
  %476 = vmatmul.f32.gmra.mxu0 %v329
  %v477 = vpop.f32.mrf.mxu0
  %v478 = vadd.f32 0.0, %v477
  %479 = vmatmul.f32.gmra.mxu0 %v332
  %v480 = vpop.f32.mrf.mxu0
  %v481 = vadd.f32 0.0, %v480
  %482 = vmatmul.f32.gmra.mxu0 %v335
  %v483 = vpop.f32.mrf.mxu0
  %v484 = vadd.f32 0.0, %v483
  %485 = vdwg.mxu0
  %486 = vmatpush.msra.mxu0 0.0
  %487 = vmatpush.msra.mxu0 0.0
  %488 = vmatpush.msra.mxu0 0.0
  %489 = vmatpush.msra.mxu0 0.0
  %490 = vmatpush.msra.mxu0 0.0
  %491 = vmatpush.msra.mxu0 0.0
  %492 = vmatpush.msra.mxu0 0.0
  %493 = vmatpush.msra.mxu0 0.0
  %494 = vmatpush.msra.mxu0 0.0
  %495 = vmatpush.msra.mxu0 0.0
  %496 = vmatpush.msra.mxu0 0.0
  %497 = vmatpush.msra.mxu0 0.0
  %498 = vmatpush.msra.mxu0 0.0
  %499 = vmatpush.msra.mxu0 0.0
  %500 = vmatpush.msra.mxu0 0.0
  %501 = vmatpush.msra.mxu0 %v346
  %502 = vmatmul.f32.gmra.mxu0 %v326
  %v503 = vpop.f32.mrf.mxu0
  %v504 = vadd.f32 0.0, %v503
  %505 = vmatmul.f32.gmra.mxu0 %v329
  %v506 = vpop.f32.mrf.mxu0
  %v507 = vadd.f32 0.0, %v506
  %508 = vmatmul.f32.gmra.mxu0 %v332
  %v509 = vpop.f32.mrf.mxu0
  %v510 = vadd.f32 0.0, %v509
  %511 = vmatmul.f32.gmra.mxu0 %v335
  %v512 = vpop.f32.mrf.mxu0
  %v513 = vadd.f32 0.0, %v512
  %514 = vdwg.mxu0
  %515 = vmatpush.msra.mxu0 0.0
  %516 = vmatpush.msra.mxu0 0.0
  %517 = vmatpush.msra.mxu0 0.0
  %518 = vmatpush.msra.mxu0 0.0
  %519 = vmatpush.msra.mxu0 0.0
  %520 = vmatpush.msra.mxu0 0.0
  %521 = vmatpush.msra.mxu0 0.0
  %522 = vmatpush.msra.mxu0 0.0
  %523 = vmatpush.msra.mxu0 0.0
  %524 = vmatpush.msra.mxu0 0.0
  %525 = vmatpush.msra.mxu0 0.0
  %526 = vmatpush.msra.mxu0 0.0
  %527 = vmatpush.msra.mxu0 0.0
  %528 = vmatpush.msra.mxu0 0.0
  %529 = vmatpush.msra.mxu0 0.0
  %530 = vmatpush.msra.mxu0 %v348
  %531 = vmatmul.f32.gmra.mxu0 %v326
  %v532 = vpop.f32.mrf.mxu0
  %v533 = vadd.f32 0.0, %v532
  %534 = vmatmul.f32.gmra.mxu0 %v329
  %v535 = vpop.f32.mrf.mxu0
  %v536 = vadd.f32 0.0, %v535
  %537 = vmatmul.f32.gmra.mxu0 %v332
  %v538 = vpop.f32.mrf.mxu0
  %v539 = vadd.f32 0.0, %v538
  %540 = vmatmul.f32.gmra.mxu0 %v335
  %v541 = vpop.f32.mrf.mxu0
  %v542 = vadd.f32 0.0, %v541
  %543 = vdwg.mxu0
  %544 = vmatpush.msra.mxu0 0.0
  %545 = vmatpush.msra.mxu0 0.0
  %546 = vmatpush.msra.mxu0 0.0
  %547 = vmatpush.msra.mxu0 0.0
  %548 = vmatpush.msra.mxu0 0.0
  %549 = vmatpush.msra.mxu0 0.0
  %550 = vmatpush.msra.mxu0 0.0
  %551 = vmatpush.msra.mxu0 0.0
  %552 = vmatpush.msra.mxu0 0.0
  %553 = vmatpush.msra.mxu0 0.0
  %554 = vmatpush.msra.mxu0 0.0
  %555 = vmatpush.msra.mxu0 0.0
  %556 = vmatpush.msra.mxu0 0.0
  %557 = vmatpush.msra.mxu0 0.0
  %558 = vmatpush.msra.mxu0 0.0
  %559 = vmatpush.msra.mxu0 %v350
  %560 = vmatmul.f32.gmra.mxu0 %v326
  %v561 = vpop.f32.mrf.mxu0
  %v562 = vadd.f32 0.0, %v561
  %563 = vmatmul.f32.gmra.mxu0 %v329
  %v564 = vpop.f32.mrf.mxu0
  %v565 = vadd.f32 0.0, %v564
  %566 = vmatmul.f32.gmra.mxu0 %v332
  %v567 = vpop.f32.mrf.mxu0
  %v568 = vadd.f32 0.0, %v567
  %569 = vmatmul.f32.gmra.mxu0 %v335
  %v570 = vpop.f32.mrf.mxu0
  %v571 = vadd.f32 0.0, %v570
  %572 = vdwg.mxu0
  %573 = vmatpush.msra.mxu0 0.0
  %574 = vmatpush.msra.mxu0 0.0
  %575 = vmatpush.msra.mxu0 0.0
  %576 = vmatpush.msra.mxu0 0.0
  %577 = vmatpush.msra.mxu0 0.0
  %578 = vmatpush.msra.mxu0 0.0
  %579 = vmatpush.msra.mxu0 0.0
  %580 = vmatpush.msra.mxu0 0.0
  %581 = vmatpush.msra.mxu0 0.0
  %582 = vmatpush.msra.mxu0 0.0
  %583 = vmatpush.msra.mxu0 0.0
  %584 = vmatpush.msra.mxu0 0.0
  %585 = vmatpush.msra.mxu0 0.0
  %586 = vmatpush.msra.mxu0 0.0
  %587 = vmatpush.msra.mxu0 0.0
  %588 = vmatpush.msra.mxu0 %v352
  %589 = vmatmul.f32.gmra.mxu0 %v326
  %v590 = vpop.f32.mrf.mxu0
  %v591 = vadd.f32 0.0, %v590
  %592 = vmatmul.f32.gmra.mxu0 %v329
  %v593 = vpop.f32.mrf.mxu0
  %v594 = vadd.f32 0.0, %v593
  %595 = vmatmul.f32.gmra.mxu0 %v332
  %v596 = vpop.f32.mrf.mxu0
  %v597 = vadd.f32 0.0, %v596
  %598 = vmatmul.f32.gmra.mxu0 %v335
  %v599 = vpop.f32.mrf.mxu0
  %v600 = vadd.f32 0.0, %v599
  %601 = vdwg.mxu0
  %602 = vmatpush.msra.mxu0 0.0
  %603 = vmatpush.msra.mxu0 0.0
  %604 = vmatpush.msra.mxu0 0.0
  %605 = vmatpush.msra.mxu0 0.0
  %606 = vmatpush.msra.mxu0 0.0
  %607 = vmatpush.msra.mxu0 0.0
  %608 = vmatpush.msra.mxu0 0.0
  %609 = vmatpush.msra.mxu0 0.0
  %610 = vmatpush.msra.mxu0 0.0
  %611 = vmatpush.msra.mxu0 0.0
  %612 = vmatpush.msra.mxu0 0.0
  %613 = vmatpush.msra.mxu0 0.0
  %614 = vmatpush.msra.mxu0 0.0
  %615 = vmatpush.msra.mxu0 0.0
  %616 = vmatpush.msra.mxu0 0.0
  %617 = vmatpush.msra.mxu0 %v354
  %618 = vmatmul.f32.gmra.mxu0 %v326
  %v619 = vpop.f32.mrf.mxu0
  %v620 = vadd.f32 0.0, %v619
  %621 = vmatmul.f32.gmra.mxu0 %v329
  %v622 = vpop.f32.mrf.mxu0
  %v623 = vadd.f32 0.0, %v622
  %624 = vmatmul.f32.gmra.mxu0 %v332
  %v625 = vpop.f32.mrf.mxu0
  %v626 = vadd.f32 0.0, %v625
  %627 = vmatmul.f32.gmra.mxu0 %v335
  %v628 = vpop.f32.mrf.mxu0
  %v629 = vadd.f32 0.0, %v628
  %630 = vdwg.mxu0
  %631 = vmatpush.msra.mxu0 0.0
  %632 = vmatpush.msra.mxu0 0.0
  %633 = vmatpush.msra.mxu0 0.0
  %634 = vmatpush.msra.mxu0 0.0
  %635 = vmatpush.msra.mxu0 0.0
  %636 = vmatpush.msra.mxu0 0.0
  %637 = vmatpush.msra.mxu0 0.0
  %638 = vmatpush.msra.mxu0 0.0
  %639 = vmatpush.msra.mxu0 0.0
  %640 = vmatpush.msra.mxu0 0.0
  %641 = vmatpush.msra.mxu0 0.0
  %642 = vmatpush.msra.mxu0 0.0
  %643 = vmatpush.msra.mxu0 0.0
  %644 = vmatpush.msra.mxu0 0.0
  %645 = vmatpush.msra.mxu0 0.0
  %646 = vmatpush.msra.mxu0 %v356
  %647 = vmatmul.f32.gmra.mxu0 %v326
  %v648 = vpop.f32.mrf.mxu0
  %v649 = vadd.f32 0.0, %v648
  %650 = vmatmul.f32.gmra.mxu0 %v329
  %v651 = vpop.f32.mrf.mxu0
  %v652 = vadd.f32 0.0, %v651
  %653 = vmatmul.f32.gmra.mxu0 %v332
  %v654 = vpop.f32.mrf.mxu0
  %v655 = vadd.f32 0.0, %v654
  %656 = vmatmul.f32.gmra.mxu0 %v335
  %v657 = vpop.f32.mrf.mxu0
  %v658 = vadd.f32 0.0, %v657
  %659 = vdwg.mxu0
  %660 = vmatpush.msra.mxu0 0.0
  %661 = vmatpush.msra.mxu0 0.0
  %662 = vmatpush.msra.mxu0 0.0
  %663 = vmatpush.msra.mxu0 0.0
  %664 = vmatpush.msra.mxu0 0.0
  %665 = vmatpush.msra.mxu0 0.0
  %666 = vmatpush.msra.mxu0 0.0
  %667 = vmatpush.msra.mxu0 0.0
  %668 = vmatpush.msra.mxu0 0.0
  %669 = vmatpush.msra.mxu0 0.0
  %670 = vmatpush.msra.mxu0 0.0
  %671 = vmatpush.msra.mxu0 0.0
  %672 = vmatpush.msra.mxu0 0.0
  %673 = vmatpush.msra.mxu0 0.0
  %674 = vmatpush.msra.mxu0 0.0
  %675 = vmatpush.msra.mxu0 %v358
  %676 = vmatmul.f32.gmra.mxu0 %v326
  %v677 = vpop.f32.mrf.mxu0
  %v678 = vadd.f32 0.0, %v677
  %679 = vmatmul.f32.gmra.mxu0 %v329
  %v680 = vpop.f32.mrf.mxu0
  %v681 = vadd.f32 0.0, %v680
  %682 = vmatmul.f32.gmra.mxu0 %v332
  %v683 = vpop.f32.mrf.mxu0
  %v684 = vadd.f32 0.0, %v683
  %685 = vmatmul.f32.gmra.mxu0 %v335
  %v686 = vpop.f32.mrf.mxu0
  %v687 = vadd.f32 0.0, %v686
  %688 = vdwg.mxu0
  %689 = vmatpush.msra.mxu0 0.0
  %690 = vmatpush.msra.mxu0 0.0
  %691 = vmatpush.msra.mxu0 0.0
  %692 = vmatpush.msra.mxu0 0.0
  %693 = vmatpush.msra.mxu0 0.0
  %694 = vmatpush.msra.mxu0 0.0
  %695 = vmatpush.msra.mxu0 0.0
  %696 = vmatpush.msra.mxu0 0.0
  %697 = vmatpush.msra.mxu0 0.0
  %698 = vmatpush.msra.mxu0 0.0
  %699 = vmatpush.msra.mxu0 0.0
  %700 = vmatpush.msra.mxu0 0.0
  %701 = vmatpush.msra.mxu0 0.0
  %702 = vmatpush.msra.mxu0 0.0
  %703 = vmatpush.msra.mxu0 0.0
  %704 = vmatpush.msra.mxu0 %v360
  %705 = vmatmul.f32.gmra.mxu0 %v326
  %v706 = vpop.f32.mrf.mxu0
  %v707 = vadd.f32 0.0, %v706
  %708 = vmatmul.f32.gmra.mxu0 %v329
  %v709 = vpop.f32.mrf.mxu0
  %v710 = vadd.f32 0.0, %v709
  %711 = vmatmul.f32.gmra.mxu0 %v332
  %v712 = vpop.f32.mrf.mxu0
  %v713 = vadd.f32 0.0, %v712
  %714 = vmatmul.f32.gmra.mxu0 %v335
  %v715 = vpop.f32.mrf.mxu0
  %v716 = vadd.f32 0.0, %v715
  %717 = vdwg.mxu0
  %718 = vmatpush.msra.mxu0 0.0
  %719 = vmatpush.msra.mxu0 0.0
  %720 = vmatpush.msra.mxu0 0.0
  %721 = vmatpush.msra.mxu0 0.0
  %722 = vmatpush.msra.mxu0 0.0
  %723 = vmatpush.msra.mxu0 0.0
  %724 = vmatpush.msra.mxu0 0.0
  %725 = vmatpush.msra.mxu0 0.0
  %726 = vmatpush.msra.mxu0 0.0
  %727 = vmatpush.msra.mxu0 0.0
  %728 = vmatpush.msra.mxu0 0.0
  %729 = vmatpush.msra.mxu0 0.0
  %730 = vmatpush.msra.mxu0 0.0
  %731 = vmatpush.msra.mxu0 0.0
  %732 = vmatpush.msra.mxu0 0.0
  %733 = vmatpush.msra.mxu0 %v362
  %734 = vmatmul.f32.gmra.mxu0 %v326
  %v735 = vpop.f32.mrf.mxu0
  %v736 = vadd.f32 0.0, %v735
  %737 = vmatmul.f32.gmra.mxu0 %v329
  %v738 = vpop.f32.mrf.mxu0
  %v739 = vadd.f32 0.0, %v738
  %740 = vmatmul.f32.gmra.mxu0 %v332
  %v741 = vpop.f32.mrf.mxu0
  %v742 = vadd.f32 0.0, %v741
  %743 = vmatmul.f32.gmra.mxu0 %v335
  %v744 = vpop.f32.mrf.mxu0
  %v745 = vadd.f32 0.0, %v744
  %746 = vdwg.mxu0
  %747 = vmatpush.msra.mxu0 0.0
  %748 = vmatpush.msra.mxu0 0.0
  %749 = vmatpush.msra.mxu0 0.0
  %750 = vmatpush.msra.mxu0 0.0
  %751 = vmatpush.msra.mxu0 0.0
  %752 = vmatpush.msra.mxu0 0.0
  %753 = vmatpush.msra.mxu0 0.0
  %754 = vmatpush.msra.mxu0 0.0
  %755 = vmatpush.msra.mxu0 0.0
  %756 = vmatpush.msra.mxu0 0.0
  %757 = vmatpush.msra.mxu0 0.0
  %758 = vmatpush.msra.mxu0 0.0
  %759 = vmatpush.msra.mxu0 0.0
  %760 = vmatpush.msra.mxu0 0.0
  %761 = vmatpush.msra.mxu0 0.0
  %762 = vmatpush.msra.mxu0 %v364
  %763 = vmatmul.f32.gmra.mxu0 %v326
  %v764 = vpop.f32.mrf.mxu0
  %v765 = vadd.f32 0.0, %v764
  %766 = vmatmul.f32.gmra.mxu0 %v329
  %v767 = vpop.f32.mrf.mxu0
  %v768 = vadd.f32 0.0, %v767
  %769 = vmatmul.f32.gmra.mxu0 %v332
  %v770 = vpop.f32.mrf.mxu0
  %v771 = vadd.f32 0.0, %v770
  %772 = vmatmul.f32.gmra.mxu0 %v335
  %v773 = vpop.f32.mrf.mxu0
  %v774 = vadd.f32 0.0, %v773
  %775 = vdwg.mxu0
  %776 = vmatpush.msra.mxu0 0.0
  %777 = vmatpush.msra.mxu0 0.0
  %778 = vmatpush.msra.mxu0 0.0
  %779 = vmatpush.msra.mxu0 0.0
  %780 = vmatpush.msra.mxu0 0.0
  %781 = vmatpush.msra.mxu0 0.0
  %782 = vmatpush.msra.mxu0 0.0
  %783 = vmatpush.msra.mxu0 0.0
  %784 = vmatpush.msra.mxu0 0.0
  %785 = vmatpush.msra.mxu0 0.0
  %786 = vmatpush.msra.mxu0 0.0
  %787 = vmatpush.msra.mxu0 0.0
  %788 = vmatpush.msra.mxu0 0.0
  %789 = vmatpush.msra.mxu0 0.0
  %790 = vmatpush.msra.mxu0 0.0
  %791 = vmatpush.msra.mxu0 %v366
  %792 = vmatmul.f32.gmra.mxu0 %v326
  %v793 = vpop.f32.mrf.mxu0
  %v794 = vadd.f32 0.0, %v793
  %795 = vmatmul.f32.gmra.mxu0 %v329
  %v796 = vpop.f32.mrf.mxu0
  %v797 = vadd.f32 0.0, %v796
  %798 = vmatmul.f32.gmra.mxu0 %v332
  %v799 = vpop.f32.mrf.mxu0
  %v800 = vadd.f32 0.0, %v799
  %801 = vmatmul.f32.gmra.mxu0 %v335
  %v802 = vpop.f32.mrf.mxu0
  %v803 = vadd.f32 0.0, %v802
  %804 = vdwg.mxu0
  %805 = vmatpush.msra.mxu0 0.0
  %806 = vmatpush.msra.mxu0 0.0
  %807 = vmatpush.msra.mxu0 0.0
  %808 = vmatpush.msra.mxu0 0.0
  %809 = vmatpush.msra.mxu0 0.0
  %810 = vmatpush.msra.mxu0 0.0
  %811 = vmatpush.msra.mxu0 0.0
  %812 = vmatpush.msra.mxu0 0.0
  %813 = vmatpush.msra.mxu0 0.0
  %814 = vmatpush.msra.mxu0 0.0
  %815 = vmatpush.msra.mxu0 0.0
  %816 = vmatpush.msra.mxu0 0.0
  %817 = vmatpush.msra.mxu0 0.0
  %818 = vmatpush.msra.mxu0 0.0
  %819 = vmatpush.msra.mxu0 0.0
  %820 = vmatpush.msra.mxu0 %v368
  %821 = vmatmul.f32.gmra.mxu0 %v326
  %v822 = vpop.f32.mrf.mxu0
  %v823 = vadd.f32 0.0, %v822
  %824 = vmatmul.f32.gmra.mxu0 %v329
  %v825 = vpop.f32.mrf.mxu0
  %v826 = vadd.f32 0.0, %v825
  %827 = vmatmul.f32.gmra.mxu0 %v332
  %v828 = vpop.f32.mrf.mxu0
  %v829 = vadd.f32 0.0, %v828
  %830 = vmatmul.f32.gmra.mxu0 %v335
  %v831 = vpop.f32.mrf.mxu0
  %v832 = vadd.f32 0.0, %v831
  %833 = vdwg.mxu0
  %v834 = vmax.f32 %v388, 0.0
  %v835 = vmax.f32 %v417, 0.0
  %v836 = vmax.f32 %v446, 0.0
  %v837 = vmax.f32 %v475, 0.0
  %v838 = vmax.f32 %v504, 0.0
  %v839 = vmax.f32 %v533, 0.0
  %v840 = vmax.f32 %v562, 0.0
  %v841 = vmax.f32 %v591, 0.0
  %v842 = vmax.f32 %v620, 0.0
  %v843 = vmax.f32 %v649, 0.0
  %v844 = vmax.f32 %v678, 0.0
  %v845 = vmax.f32 %v707, 0.0
  %v846 = vmax.f32 %v736, 0.0
  %v847 = vmax.f32 %v765, 0.0
  %v848 = vmax.f32 %v794, 0.0
  %v849 = vmax.f32 %v823, 0.0
  %v850 = vmax.f32 %v391, 0.0
  %v851 = vmax.f32 %v420, 0.0
  %v852 = vmax.f32 %v449, 0.0
  %v853 = vmax.f32 %v478, 0.0
  %v854 = vmax.f32 %v507, 0.0
  %v855 = vmax.f32 %v536, 0.0
  %v856 = vmax.f32 %v565, 0.0
  %v857 = vmax.f32 %v594, 0.0
  %v858 = vmax.f32 %v623, 0.0
  %v859 = vmax.f32 %v652, 0.0
  %v860 = vmax.f32 %v681, 0.0
  %v861 = vmax.f32 %v710, 0.0
  %v862 = vmax.f32 %v739, 0.0
  %v863 = vmax.f32 %v768, 0.0
  %v864 = vmax.f32 %v797, 0.0
  %v865 = vmax.f32 %v826, 0.0
  %v866 = vmax.f32 %v394, 0.0
  %v867 = vmax.f32 %v423, 0.0
  %v868 = vmax.f32 %v452, 0.0
  %v869 = vmax.f32 %v481, 0.0
  %v870 = vmax.f32 %v510, 0.0
  %v871 = vmax.f32 %v539, 0.0
  %v872 = vmax.f32 %v568, 0.0
  %v873 = vmax.f32 %v597, 0.0
  %v874 = vmax.f32 %v626, 0.0
  %v875 = vmax.f32 %v655, 0.0
  %v876 = vmax.f32 %v684, 0.0
  %v877 = vmax.f32 %v713, 0.0
  %v878 = vmax.f32 %v742, 0.0
  %v879 = vmax.f32 %v771, 0.0
  %v880 = vmax.f32 %v800, 0.0
  %v881 = vmax.f32 %v829, 0.0
  %v882 = vmax.f32 %v397, 0.0
  %v883 = vmax.f32 %v426, 0.0
  %v884 = vmax.f32 %v455, 0.0
  %v885 = vmax.f32 %v484, 0.0
  %v886 = vmax.f32 %v513, 0.0
  %v887 = vmax.f32 %v542, 0.0
  %v888 = vmax.f32 %v571, 0.0
  %v889 = vmax.f32 %v600, 0.0
  %v890 = vmax.f32 %v629, 0.0
  %v891 = vmax.f32 %v658, 0.0
  %v892 = vmax.f32 %v687, 0.0
  %v893 = vmax.f32 %v716, 0.0
  %v894 = vmax.f32 %v745, 0.0
  %v895 = vmax.f32 %v774, 0.0
  %v896 = vmax.f32 %v803, 0.0
  %v897 = vmax.f32 %v832, 0.0
  %898 = vmatpush.msra.mxu0 %v40
  %899 = vmatpush.msra.mxu0 %v39
  %900 = vmatpush.msra.mxu0 %v38
  %901 = vmatpush.msra.mxu0 %v37
  %902 = vmatpush.msra.mxu0 %v36
  %903 = vmatpush.msra.mxu0 %v35
  %904 = vmatpush.msra.mxu0 %v34
  %905 = vmatpush.msra.mxu0 %v33
  %906 = vmatpush.msra.mxu0 %v32
  %907 = vmatpush.msra.mxu0 %v31
  %908 = vmatpush.msra.mxu0 %v30
  %909 = vmatpush.msra.mxu0 %v29
  %910 = vmatpush.msra.mxu0 %v28
  %911 = vmatpush.msra.mxu0 %v27
  %912 = vmatpush.msra.mxu0 %v26
  %913 = vmatpush.msra.mxu0 %v25
  %914 = vmatmul.f32.gmra.mxu0 %v834
  %v915 = vpop.f32.mrf.mxu0
  %v916 = vadd.f32 0.0, %v915
  %917 = vmatmul.f32.gmra.mxu0 %v850
  %v918 = vpop.f32.mrf.mxu0
  %v919 = vadd.f32 0.0, %v918
  %920 = vmatmul.f32.gmra.mxu0 %v866
  %v921 = vpop.f32.mrf.mxu0
  %v922 = vadd.f32 0.0, %v921
  %923 = vmatmul.f32.gmra.mxu0 %v882
  %v924 = vpop.f32.mrf.mxu0
  %v925 = vadd.f32 0.0, %v924
  %926 = vdwg.mxu0
  %927 = vmatpush.msra.mxu0 %v56
  %928 = vmatpush.msra.mxu0 %v55
  %929 = vmatpush.msra.mxu0 %v54
  %930 = vmatpush.msra.mxu0 %v53
  %931 = vmatpush.msra.mxu0 %v52
  %932 = vmatpush.msra.mxu0 %v51
  %933 = vmatpush.msra.mxu0 %v50
  %934 = vmatpush.msra.mxu0 %v49
  %935 = vmatpush.msra.mxu0 %v48
  %936 = vmatpush.msra.mxu0 %v47
  %937 = vmatpush.msra.mxu0 %v46
  %938 = vmatpush.msra.mxu0 %v45
  %939 = vmatpush.msra.mxu0 %v44
  %940 = vmatpush.msra.mxu0 %v43
  %941 = vmatpush.msra.mxu0 %v42
  %942 = vmatpush.msra.mxu0 %v41
  %943 = vmatmul.f32.gmra.mxu0 %v835
  %v944 = vpop.f32.mrf.mxu0
  %v945 = vadd.f32 %v916, %v944
  %946 = vmatmul.f32.gmra.mxu0 %v851
  %v947 = vpop.f32.mrf.mxu0
  %v948 = vadd.f32 %v919, %v947
  %949 = vmatmul.f32.gmra.mxu0 %v867
  %v950 = vpop.f32.mrf.mxu0
  %v951 = vadd.f32 %v922, %v950
  %952 = vmatmul.f32.gmra.mxu0 %v883
  %v953 = vpop.f32.mrf.mxu0
  %v954 = vadd.f32 %v925, %v953
  %955 = vdwg.mxu0
  %956 = vmatpush.msra.mxu0 %v72
  %957 = vmatpush.msra.mxu0 %v71
  %958 = vmatpush.msra.mxu0 %v70
  %959 = vmatpush.msra.mxu0 %v69
  %960 = vmatpush.msra.mxu0 %v68
  %961 = vmatpush.msra.mxu0 %v67
  %962 = vmatpush.msra.mxu0 %v66
  %963 = vmatpush.msra.mxu0 %v65
  %964 = vmatpush.msra.mxu0 %v64
  %965 = vmatpush.msra.mxu0 %v63
  %966 = vmatpush.msra.mxu0 %v62
  %967 = vmatpush.msra.mxu0 %v61
  %968 = vmatpush.msra.mxu0 %v60
  %969 = vmatpush.msra.mxu0 %v59
  %970 = vmatpush.msra.mxu0 %v58
  %971 = vmatpush.msra.mxu0 %v57
  %972 = vmatmul.f32.gmra.mxu0 %v836
  %v973 = vpop.f32.mrf.mxu0
  %v974 = vadd.f32 %v945, %v973
  %975 = vmatmul.f32.gmra.mxu0 %v852
  %v976 = vpop.f32.mrf.mxu0
  %v977 = vadd.f32 %v948, %v976
  %978 = vmatmul.f32.gmra.mxu0 %v868
  %v979 = vpop.f32.mrf.mxu0
  %v980 = vadd.f32 %v951, %v979
  %981 = vmatmul.f32.gmra.mxu0 %v884
  %v982 = vpop.f32.mrf.mxu0
  %v983 = vadd.f32 %v954, %v982
  %984 = vdwg.mxu0
  %985 = vmatpush.msra.mxu0 %v88
  %986 = vmatpush.msra.mxu0 %v87
  %987 = vmatpush.msra.mxu0 %v86
  %988 = vmatpush.msra.mxu0 %v85
  %989 = vmatpush.msra.mxu0 %v84
  %990 = vmatpush.msra.mxu0 %v83
  %991 = vmatpush.msra.mxu0 %v82
  %992 = vmatpush.msra.mxu0 %v81
  %993 = vmatpush.msra.mxu0 %v80
  %994 = vmatpush.msra.mxu0 %v79
  %995 = vmatpush.msra.mxu0 %v78
  %996 = vmatpush.msra.mxu0 %v77
  %997 = vmatpush.msra.mxu0 %v76
  %998 = vmatpush.msra.mxu0 %v75
  %999 = vmatpush.msra.mxu0 %v74
  %1000 = vmatpush.msra.mxu0 %v73
  %1001 = vmatmul.f32.gmra.mxu0 %v837
  %v1002 = vpop.f32.mrf.mxu0
  %v1003 = vadd.f32 %v974, %v1002
  %1004 = vmatmul.f32.gmra.mxu0 %v853
  %v1005 = vpop.f32.mrf.mxu0
  %v1006 = vadd.f32 %v977, %v1005
  %1007 = vmatmul.f32.gmra.mxu0 %v869
  %v1008 = vpop.f32.mrf.mxu0
  %v1009 = vadd.f32 %v980, %v1008
  %1010 = vmatmul.f32.gmra.mxu0 %v885
  %v1011 = vpop.f32.mrf.mxu0
  %v1012 = vadd.f32 %v983, %v1011
  %1013 = vdwg.mxu0
  %1014 = vmatpush.msra.mxu0 %v104
  %1015 = vmatpush.msra.mxu0 %v103
  %1016 = vmatpush.msra.mxu0 %v102
  %1017 = vmatpush.msra.mxu0 %v101
  %1018 = vmatpush.msra.mxu0 %v100
  %1019 = vmatpush.msra.mxu0 %v99
  %1020 = vmatpush.msra.mxu0 %v98
  %1021 = vmatpush.msra.mxu0 %v97
  %1022 = vmatpush.msra.mxu0 %v96
  %1023 = vmatpush.msra.mxu0 %v95
  %1024 = vmatpush.msra.mxu0 %v94
  %1025 = vmatpush.msra.mxu0 %v93
  %1026 = vmatpush.msra.mxu0 %v92
  %1027 = vmatpush.msra.mxu0 %v91
  %1028 = vmatpush.msra.mxu0 %v90
  %1029 = vmatpush.msra.mxu0 %v89
  %1030 = vmatmul.f32.gmra.mxu0 %v838
  %v1031 = vpop.f32.mrf.mxu0
  %v1032 = vadd.f32 %v1003, %v1031
  %1033 = vmatmul.f32.gmra.mxu0 %v854
  %v1034 = vpop.f32.mrf.mxu0
  %v1035 = vadd.f32 %v1006, %v1034
  %1036 = vmatmul.f32.gmra.mxu0 %v870
  %v1037 = vpop.f32.mrf.mxu0
  %v1038 = vadd.f32 %v1009, %v1037
  %1039 = vmatmul.f32.gmra.mxu0 %v886
  %v1040 = vpop.f32.mrf.mxu0
  %v1041 = vadd.f32 %v1012, %v1040
  %1042 = vdwg.mxu0
  %1043 = vmatpush.msra.mxu0 %v120
  %1044 = vmatpush.msra.mxu0 %v119
  %1045 = vmatpush.msra.mxu0 %v118
  %1046 = vmatpush.msra.mxu0 %v117
  %1047 = vmatpush.msra.mxu0 %v116
  %1048 = vmatpush.msra.mxu0 %v115
  %1049 = vmatpush.msra.mxu0 %v114
  %1050 = vmatpush.msra.mxu0 %v113
  %1051 = vmatpush.msra.mxu0 %v112
  %1052 = vmatpush.msra.mxu0 %v111
  %1053 = vmatpush.msra.mxu0 %v110
  %1054 = vmatpush.msra.mxu0 %v109
  %1055 = vmatpush.msra.mxu0 %v108
  %1056 = vmatpush.msra.mxu0 %v107
  %1057 = vmatpush.msra.mxu0 %v106
  %1058 = vmatpush.msra.mxu0 %v105
  %1059 = vmatmul.f32.gmra.mxu0 %v839
  %v1060 = vpop.f32.mrf.mxu0
  %v1061 = vadd.f32 %v1032, %v1060
  %1062 = vmatmul.f32.gmra.mxu0 %v855
  %v1063 = vpop.f32.mrf.mxu0
  %v1064 = vadd.f32 %v1035, %v1063
  %1065 = vmatmul.f32.gmra.mxu0 %v871
  %v1066 = vpop.f32.mrf.mxu0
  %v1067 = vadd.f32 %v1038, %v1066
  %1068 = vmatmul.f32.gmra.mxu0 %v887
  %v1069 = vpop.f32.mrf.mxu0
  %v1070 = vadd.f32 %v1041, %v1069
  %1071 = vdwg.mxu0
  %1072 = vmatpush.msra.mxu0 %v136
  %1073 = vmatpush.msra.mxu0 %v135
  %1074 = vmatpush.msra.mxu0 %v134
  %1075 = vmatpush.msra.mxu0 %v133
  %1076 = vmatpush.msra.mxu0 %v132
  %1077 = vmatpush.msra.mxu0 %v131
  %1078 = vmatpush.msra.mxu0 %v130
  %1079 = vmatpush.msra.mxu0 %v129
  %1080 = vmatpush.msra.mxu0 %v128
  %1081 = vmatpush.msra.mxu0 %v127
  %1082 = vmatpush.msra.mxu0 %v126
  %1083 = vmatpush.msra.mxu0 %v125
  %1084 = vmatpush.msra.mxu0 %v124
  %1085 = vmatpush.msra.mxu0 %v123
  %1086 = vmatpush.msra.mxu0 %v122
  %1087 = vmatpush.msra.mxu0 %v121
  %1088 = vmatmul.f32.gmra.mxu0 %v840
  %v1089 = vpop.f32.mrf.mxu0
  %v1090 = vadd.f32 %v1061, %v1089
  %1091 = vmatmul.f32.gmra.mxu0 %v856
  %v1092 = vpop.f32.mrf.mxu0
  %v1093 = vadd.f32 %v1064, %v1092
  %1094 = vmatmul.f32.gmra.mxu0 %v872
  %v1095 = vpop.f32.mrf.mxu0
  %v1096 = vadd.f32 %v1067, %v1095
  %1097 = vmatmul.f32.gmra.mxu0 %v888
  %v1098 = vpop.f32.mrf.mxu0
  %v1099 = vadd.f32 %v1070, %v1098
  %1100 = vdwg.mxu0
  %1101 = vmatpush.msra.mxu0 %v152
  %1102 = vmatpush.msra.mxu0 %v151
  %1103 = vmatpush.msra.mxu0 %v150
  %1104 = vmatpush.msra.mxu0 %v149
  %1105 = vmatpush.msra.mxu0 %v148
  %1106 = vmatpush.msra.mxu0 %v147
  %1107 = vmatpush.msra.mxu0 %v146
  %1108 = vmatpush.msra.mxu0 %v145
  %1109 = vmatpush.msra.mxu0 %v144
  %1110 = vmatpush.msra.mxu0 %v143
  %1111 = vmatpush.msra.mxu0 %v142
  %1112 = vmatpush.msra.mxu0 %v141
  %1113 = vmatpush.msra.mxu0 %v140
  %1114 = vmatpush.msra.mxu0 %v139
  %1115 = vmatpush.msra.mxu0 %v138
  %1116 = vmatpush.msra.mxu0 %v137
  %1117 = vmatmul.f32.gmra.mxu0 %v841
  %v1118 = vpop.f32.mrf.mxu0
  %v1119 = vadd.f32 %v1090, %v1118
  %1120 = vmatmul.f32.gmra.mxu0 %v857
  %v1121 = vpop.f32.mrf.mxu0
  %v1122 = vadd.f32 %v1093, %v1121
  %1123 = vmatmul.f32.gmra.mxu0 %v873
  %v1124 = vpop.f32.mrf.mxu0
  %v1125 = vadd.f32 %v1096, %v1124
  %1126 = vmatmul.f32.gmra.mxu0 %v889
  %v1127 = vpop.f32.mrf.mxu0
  %v1128 = vadd.f32 %v1099, %v1127
  %1129 = vdwg.mxu0
  %1130 = vmatpush.msra.mxu0 %v168
  %1131 = vmatpush.msra.mxu0 %v167
  %1132 = vmatpush.msra.mxu0 %v166
  %1133 = vmatpush.msra.mxu0 %v165
  %1134 = vmatpush.msra.mxu0 %v164
  %1135 = vmatpush.msra.mxu0 %v163
  %1136 = vmatpush.msra.mxu0 %v162
  %1137 = vmatpush.msra.mxu0 %v161
  %1138 = vmatpush.msra.mxu0 %v160
  %1139 = vmatpush.msra.mxu0 %v159
  %1140 = vmatpush.msra.mxu0 %v158
  %1141 = vmatpush.msra.mxu0 %v157
  %1142 = vmatpush.msra.mxu0 %v156
  %1143 = vmatpush.msra.mxu0 %v155
  %1144 = vmatpush.msra.mxu0 %v154
  %1145 = vmatpush.msra.mxu0 %v153
  %1146 = vmatmul.f32.gmra.mxu0 %v842
  %v1147 = vpop.f32.mrf.mxu0
  %v1148 = vadd.f32 %v1119, %v1147
  %1149 = vmatmul.f32.gmra.mxu0 %v858
  %v1150 = vpop.f32.mrf.mxu0
  %v1151 = vadd.f32 %v1122, %v1150
  %1152 = vmatmul.f32.gmra.mxu0 %v874
  %v1153 = vpop.f32.mrf.mxu0
  %v1154 = vadd.f32 %v1125, %v1153
  %1155 = vmatmul.f32.gmra.mxu0 %v890
  %v1156 = vpop.f32.mrf.mxu0
  %v1157 = vadd.f32 %v1128, %v1156
  %1158 = vdwg.mxu0
  %1159 = vmatpush.msra.mxu0 %v184
  %1160 = vmatpush.msra.mxu0 %v183
  %1161 = vmatpush.msra.mxu0 %v182
  %1162 = vmatpush.msra.mxu0 %v181
  %1163 = vmatpush.msra.mxu0 %v180
  %1164 = vmatpush.msra.mxu0 %v179
  %1165 = vmatpush.msra.mxu0 %v178
  %1166 = vmatpush.msra.mxu0 %v177
  %1167 = vmatpush.msra.mxu0 %v176
  %1168 = vmatpush.msra.mxu0 %v175
  %1169 = vmatpush.msra.mxu0 %v174
  %1170 = vmatpush.msra.mxu0 %v173
  %1171 = vmatpush.msra.mxu0 %v172
  %1172 = vmatpush.msra.mxu0 %v171
  %1173 = vmatpush.msra.mxu0 %v170
  %1174 = vmatpush.msra.mxu0 %v169
  %1175 = vmatmul.f32.gmra.mxu0 %v843
  %v1176 = vpop.f32.mrf.mxu0
  %v1177 = vadd.f32 %v1148, %v1176
  %1178 = vmatmul.f32.gmra.mxu0 %v859
  %v1179 = vpop.f32.mrf.mxu0
  %v1180 = vadd.f32 %v1151, %v1179
  %1181 = vmatmul.f32.gmra.mxu0 %v875
  %v1182 = vpop.f32.mrf.mxu0
  %v1183 = vadd.f32 %v1154, %v1182
  %1184 = vmatmul.f32.gmra.mxu0 %v891
  %v1185 = vpop.f32.mrf.mxu0
  %v1186 = vadd.f32 %v1157, %v1185
  %1187 = vdwg.mxu0
  %1188 = vmatpush.msra.mxu0 %v200
  %1189 = vmatpush.msra.mxu0 %v199
  %1190 = vmatpush.msra.mxu0 %v198
  %1191 = vmatpush.msra.mxu0 %v197
  %1192 = vmatpush.msra.mxu0 %v196
  %1193 = vmatpush.msra.mxu0 %v195
  %1194 = vmatpush.msra.mxu0 %v194
  %1195 = vmatpush.msra.mxu0 %v193
  %1196 = vmatpush.msra.mxu0 %v192
  %1197 = vmatpush.msra.mxu0 %v191
  %1198 = vmatpush.msra.mxu0 %v190
  %1199 = vmatpush.msra.mxu0 %v189
  %1200 = vmatpush.msra.mxu0 %v188
  %1201 = vmatpush.msra.mxu0 %v187
  %1202 = vmatpush.msra.mxu0 %v186
  %1203 = vmatpush.msra.mxu0 %v185
  %1204 = vmatmul.f32.gmra.mxu0 %v844
  %v1205 = vpop.f32.mrf.mxu0
  %v1206 = vadd.f32 %v1177, %v1205
  %1207 = vmatmul.f32.gmra.mxu0 %v860
  %v1208 = vpop.f32.mrf.mxu0
  %v1209 = vadd.f32 %v1180, %v1208
  %1210 = vmatmul.f32.gmra.mxu0 %v876
  %v1211 = vpop.f32.mrf.mxu0
  %v1212 = vadd.f32 %v1183, %v1211
  %1213 = vmatmul.f32.gmra.mxu0 %v892
  %v1214 = vpop.f32.mrf.mxu0
  %v1215 = vadd.f32 %v1186, %v1214
  %1216 = vdwg.mxu0
  %1217 = vmatpush.msra.mxu0 %v216
  %1218 = vmatpush.msra.mxu0 %v215
  %1219 = vmatpush.msra.mxu0 %v214
  %1220 = vmatpush.msra.mxu0 %v213
  %1221 = vmatpush.msra.mxu0 %v212
  %1222 = vmatpush.msra.mxu0 %v211
  %1223 = vmatpush.msra.mxu0 %v210
  %1224 = vmatpush.msra.mxu0 %v209
  %1225 = vmatpush.msra.mxu0 %v208
  %1226 = vmatpush.msra.mxu0 %v207
  %1227 = vmatpush.msra.mxu0 %v206
  %1228 = vmatpush.msra.mxu0 %v205
  %1229 = vmatpush.msra.mxu0 %v204
  %1230 = vmatpush.msra.mxu0 %v203
  %1231 = vmatpush.msra.mxu0 %v202
  %1232 = vmatpush.msra.mxu0 %v201
  %1233 = vmatmul.f32.gmra.mxu0 %v845
  %v1234 = vpop.f32.mrf.mxu0
  %v1235 = vadd.f32 %v1206, %v1234
  %1236 = vmatmul.f32.gmra.mxu0 %v861
  %v1237 = vpop.f32.mrf.mxu0
  %v1238 = vadd.f32 %v1209, %v1237
  %1239 = vmatmul.f32.gmra.mxu0 %v877
  %v1240 = vpop.f32.mrf.mxu0
  %v1241 = vadd.f32 %v1212, %v1240
  %1242 = vmatmul.f32.gmra.mxu0 %v893
  %v1243 = vpop.f32.mrf.mxu0
  %v1244 = vadd.f32 %v1215, %v1243
  %1245 = vdwg.mxu0
  %1246 = vmatpush.msra.mxu0 %v232
  %1247 = vmatpush.msra.mxu0 %v231
  %1248 = vmatpush.msra.mxu0 %v230
  %1249 = vmatpush.msra.mxu0 %v229
  %1250 = vmatpush.msra.mxu0 %v228
  %1251 = vmatpush.msra.mxu0 %v227
  %1252 = vmatpush.msra.mxu0 %v226
  %1253 = vmatpush.msra.mxu0 %v225
  %1254 = vmatpush.msra.mxu0 %v224
  %1255 = vmatpush.msra.mxu0 %v223
  %1256 = vmatpush.msra.mxu0 %v222
  %1257 = vmatpush.msra.mxu0 %v221
  %1258 = vmatpush.msra.mxu0 %v220
  %1259 = vmatpush.msra.mxu0 %v219
  %1260 = vmatpush.msra.mxu0 %v218
  %1261 = vmatpush.msra.mxu0 %v217
  %1262 = vmatmul.f32.gmra.mxu0 %v846
  %v1263 = vpop.f32.mrf.mxu0
  %v1264 = vadd.f32 %v1235, %v1263
  %1265 = vmatmul.f32.gmra.mxu0 %v862
  %v1266 = vpop.f32.mrf.mxu0
  %v1267 = vadd.f32 %v1238, %v1266
  %1268 = vmatmul.f32.gmra.mxu0 %v878
  %v1269 = vpop.f32.mrf.mxu0
  %v1270 = vadd.f32 %v1241, %v1269
  %1271 = vmatmul.f32.gmra.mxu0 %v894
  %v1272 = vpop.f32.mrf.mxu0
  %v1273 = vadd.f32 %v1244, %v1272
  %1274 = vdwg.mxu0
  %1275 = vmatpush.msra.mxu0 %v248
  %1276 = vmatpush.msra.mxu0 %v247
  %1277 = vmatpush.msra.mxu0 %v246
  %1278 = vmatpush.msra.mxu0 %v245
  %1279 = vmatpush.msra.mxu0 %v244
  %1280 = vmatpush.msra.mxu0 %v243
  %1281 = vmatpush.msra.mxu0 %v242
  %1282 = vmatpush.msra.mxu0 %v241
  %1283 = vmatpush.msra.mxu0 %v240
  %1284 = vmatpush.msra.mxu0 %v239
  %1285 = vmatpush.msra.mxu0 %v238
  %1286 = vmatpush.msra.mxu0 %v237
  %1287 = vmatpush.msra.mxu0 %v236
  %1288 = vmatpush.msra.mxu0 %v235
  %1289 = vmatpush.msra.mxu0 %v234
  %1290 = vmatpush.msra.mxu0 %v233
  %1291 = vmatmul.f32.gmra.mxu0 %v847
  %v1292 = vpop.f32.mrf.mxu0
  %v1293 = vadd.f32 %v1264, %v1292
  %1294 = vmatmul.f32.gmra.mxu0 %v863
  %v1295 = vpop.f32.mrf.mxu0
  %v1296 = vadd.f32 %v1267, %v1295
  %1297 = vmatmul.f32.gmra.mxu0 %v879
  %v1298 = vpop.f32.mrf.mxu0
  %v1299 = vadd.f32 %v1270, %v1298
  %1300 = vmatmul.f32.gmra.mxu0 %v895
  %v1301 = vpop.f32.mrf.mxu0
  %v1302 = vadd.f32 %v1273, %v1301
  %1303 = vdwg.mxu0
  %1304 = vmatpush.msra.mxu0 %v264
  %1305 = vmatpush.msra.mxu0 %v263
  %1306 = vmatpush.msra.mxu0 %v262
  %1307 = vmatpush.msra.mxu0 %v261
  %1308 = vmatpush.msra.mxu0 %v260
  %1309 = vmatpush.msra.mxu0 %v259
  %1310 = vmatpush.msra.mxu0 %v258
  %1311 = vmatpush.msra.mxu0 %v257
  %1312 = vmatpush.msra.mxu0 %v256
  %1313 = vmatpush.msra.mxu0 %v255
  %1314 = vmatpush.msra.mxu0 %v254
  %1315 = vmatpush.msra.mxu0 %v253
  %1316 = vmatpush.msra.mxu0 %v252
  %1317 = vmatpush.msra.mxu0 %v251
  %1318 = vmatpush.msra.mxu0 %v250
  %1319 = vmatpush.msra.mxu0 %v249
  %1320 = vmatmul.f32.gmra.mxu0 %v848
  %v1321 = vpop.f32.mrf.mxu0
  %v1322 = vadd.f32 %v1293, %v1321
  %1323 = vmatmul.f32.gmra.mxu0 %v864
  %v1324 = vpop.f32.mrf.mxu0
  %v1325 = vadd.f32 %v1296, %v1324
  %1326 = vmatmul.f32.gmra.mxu0 %v880
  %v1327 = vpop.f32.mrf.mxu0
  %v1328 = vadd.f32 %v1299, %v1327
  %1329 = vmatmul.f32.gmra.mxu0 %v896
  %v1330 = vpop.f32.mrf.mxu0
  %v1331 = vadd.f32 %v1302, %v1330
  %1332 = vdwg.mxu0
  %1333 = vmatpush.msra.mxu0 %v280
  %1334 = vmatpush.msra.mxu0 %v279
  %1335 = vmatpush.msra.mxu0 %v278
  %1336 = vmatpush.msra.mxu0 %v277
  %1337 = vmatpush.msra.mxu0 %v276
  %1338 = vmatpush.msra.mxu0 %v275
  %1339 = vmatpush.msra.mxu0 %v274
  %1340 = vmatpush.msra.mxu0 %v273
  %1341 = vmatpush.msra.mxu0 %v272
  %1342 = vmatpush.msra.mxu0 %v271
  %1343 = vmatpush.msra.mxu0 %v270
  %1344 = vmatpush.msra.mxu0 %v269
  %1345 = vmatpush.msra.mxu0 %v268
  %1346 = vmatpush.msra.mxu0 %v267
  %1347 = vmatpush.msra.mxu0 %v266
  %1348 = vmatpush.msra.mxu0 %v265
  %1349 = vmatmul.f32.gmra.mxu0 %v849
  %v1350 = vpop.f32.mrf.mxu0
  %v1351 = vadd.f32 %v1322, %v1350
  %1352 = vmatmul.f32.gmra.mxu0 %v865
  %v1353 = vpop.f32.mrf.mxu0
  %v1354 = vadd.f32 %v1325, %v1353
  %1355 = vmatmul.f32.gmra.mxu0 %v881
  %v1356 = vpop.f32.mrf.mxu0
  %v1357 = vadd.f32 %v1328, %v1356
  %1358 = vmatmul.f32.gmra.mxu0 %v897
  %v1359 = vpop.f32.mrf.mxu0
  %v1360 = vadd.f32 %v1331, %v1359
  %1361 = vdwg.mxu0
  %vm1362 = vcmask 64512
  %1363 = vst.msk [vmem:[#allocation2] sm:$0xff] %vm1362, %v1351
  %1364 = vst.msk [vmem:[#allocation2 + $0x8] sm:$0xff] %vm1362, %v1354
  %1365 = vst.msk [vmem:[#allocation2 + $0x10] sm:$0xff] %vm1362, %v1357
  %1366 = vst.msk [vmem:[#allocation2 + $0x18] sm:$0xff] %vm1362, %v1360
  %v1367 = vld [vmem:[#allocation2] sm:$0xff]
  %v1368 = vld [vmem:[#allocation2 + $0x8] sm:$0xff]
  %v1369 = vld [vmem:[#allocation2 + $0x10] sm:$0xff]
  %v1370 = vld [vmem:[#allocation2 + $0x18] sm:$0xff]
  %v1371 = vmul.f32 %v1367, %v1367
  %v1372 = vmul.f32 %v1368, %v1368
  %v1373 = vmul.f32 %v1369, %v1369
  %v1374 = vmul.f32 %v1370, %v1370
  %v1375 = vsel %vm1362, %v1371, 0.0
  %v1376 = vsel %vm1362, %v1372, 0.0
  %v1377 = vadd.f32 %v1375, %v1376
  %v1378 = vsel %vm1362, %v1373, 0.0
  %v1379 = vadd.f32 %v1377, %v1378
  %v1380 = vsel %vm1362, %v1374, 0.0
  %v1381 = vadd.f32 %v1379, %v1380
  %v1382 = vrot.slane %v1381, 4
  %v1383 = vadd.f32 %v1381, %v1382
  %v1384 = vrot.slane %v1383, 2
  %v1385 = vadd.f32 %v1383, %v1384
  %v1386 = vrot.slane %v1385, 1
  %v1387 = vadd.f32 %v1385, %v1386
  %v1388 = vadd.f32 %v1387, 6.5536e-06
  %s1389 = sld [smem:[#allocation3]]
  %v1390 = vrsqrt.pop %v1388
  %v1391 = vmul.f32 %v1390, %v1388
  %v1392 = vmul.f32 %v1391, %v1390
  %v1393 = vmul.f32 0.5, %v1392
  %v1394 = vsub.f32 1.5, %v1393
  %v1395 = vmul.f32 %v1390, %v1394
  %vm1396 = vweird.f32 %v1388
  %vm1397 = vweird.f32 %v1390
  %vm1398 = vmor %vm1396, %vm1397
  %v1399 = vsel %vm1398, %v1390, %v1395
  %v1400 = vstv %s1389
  %v1401 = vmul.f32 %v1400, %v1399
  %v1402 = vld [vmem:[%s3] sm:$0xff]
  %v1403 = vld [vmem:[%s3 + $0x8] sm:$0xff]
  %v1404 = vld [vmem:[%s3 + $0x10] sm:$0xff]
  %v1405 = vld [vmem:[%s3 + $0x18] sm:$0xff]
  %v1406 = vld [vmem:[%s3 + $0x20] sm:$0xff]
  %v1407 = vld [vmem:[%s3 + $0x28] sm:$0xff]
  %v1408 = vld [vmem:[%s3 + $0x30] sm:$0xff]
  %v1409 = vld [vmem:[%s3 + $0x38] sm:$0xff]
  %v1410 = vld [vmem:[%s3 + $0x40] sm:$0xff]
  %v1411 = vld [vmem:[%s3 + $0x48] sm:$0xff]
  %v1412 = vld [vmem:[%s3 + $0x50] sm:$0xff]
  %v1413 = vld [vmem:[%s3 + $0x58] sm:$0xff]
  %v1414 = vld [vmem:[%s3 + $0x60] sm:$0xff]
  %v1415 = vld [vmem:[%s3 + $0x68] sm:$0xff]
  %v1416 = vld [vmem:[%s3 + $0x70] sm:$0xff]
  %v1417 = vld [vmem:[%s3 + $0x78] sm:$0xff]
  %v1418 = vmul.f32 %v1367, %v1401
  %v1419 = vmul.f32 %v1368, %v1401
  %v1420 = vmul.f32 %v1369, %v1401
  %v1421 = vmul.f32 %v1370, %v1401
  %vm1422 = vcmask 261120
  %v1424 = vsel %vm1422, %v1402, 0
  %v1427 = vsel %vm1422, %v1403, 0
  %v1430 = vsel %vm1422, %v1404, 0
  %v1433 = vsel %vm1422, %v1405, 0
  %v1436 = vsel %vm1422, %v1406, 0
  %v1439 = vsel %vm1422, %v1407, 0
  %v1442 = vsel %vm1422, %v1408, 0
  %v1445 = vsel %vm1422, %v1409, 0
  %v1448 = vsel %vm1422, %v1410, 0
  %v1451 = vsel %vm1422, %v1411, 0
  %v1454 = vsel %vm1422, %v1412, 0
  %v1457 = vsel %vm1422, %v1413, 0
  %v1460 = vsel %vm1422, %v1414, 0
  %v1463 = vsel %vm1422, %v1415, 0
  %v1466 = vsel %vm1422, %v1416, 0
  %v1469 = vsel %vm1422, %v1417, 0
  %1471 = vmatpush.msra.mxu0 0.0
  %1472 = vmatpush.msra.mxu0 0.0
  %1473 = vmatpush.msra.mxu0 0.0
  %1474 = vmatpush.msra.mxu0 0.0
  %1475 = vmatpush.msra.mxu0 0.0
  %1476 = vmatpush.msra.mxu0 0.0
  %1477 = vmatpush.msra.mxu0 0.0
  %1478 = vmatpush.msra.mxu0 0.0
  %1479 = vmatpush.msra.mxu0 0.0
  %1480 = vmatpush.msra.mxu0 0.0
  %1481 = vmatpush.msra.mxu0 0.0
  %1482 = vmatpush.msra.mxu0 0.0
  %1483 = vmatpush.msra.mxu0 %v1421
  %1484 = vmatpush.msra.mxu0 %v1420
  %1485 = vmatpush.msra.mxu0 %v1419
  %1486 = vmatpush.msra.mxu0 %v1418
  %1487 = vmatmul.f32.gmra.mxu0 %v1424
  %v1488 = vpop.f32.mrf.mxu0
  %v1489 = vadd.f32 0.0, %v1488
  %1490 = vmatmul.f32.gmra.mxu0 %v1427
  %v1491 = vpop.f32.mrf.mxu0
  %v1492 = vadd.f32 0.0, %v1491
  %1493 = vmatmul.f32.gmra.mxu0 %v1430
  %v1494 = vpop.f32.mrf.mxu0
  %v1495 = vadd.f32 0.0, %v1494
  %1496 = vmatmul.f32.gmra.mxu0 %v1433
  %v1497 = vpop.f32.mrf.mxu0
  %v1498 = vadd.f32 0.0, %v1497
  %1499 = vmatmul.f32.gmra.mxu0 %v1436
  %v1500 = vpop.f32.mrf.mxu0
  %v1501 = vadd.f32 0.0, %v1500
  %1502 = vmatmul.f32.gmra.mxu0 %v1439
  %v1503 = vpop.f32.mrf.mxu0
  %v1504 = vadd.f32 0.0, %v1503
  %1505 = vmatmul.f32.gmra.mxu0 %v1442
  %v1506 = vpop.f32.mrf.mxu0
  %v1507 = vadd.f32 0.0, %v1506
  %1508 = vmatmul.f32.gmra.mxu0 %v1445
  %v1509 = vpop.f32.mrf.mxu0
  %v1510 = vadd.f32 0.0, %v1509
  %1511 = vmatmul.f32.gmra.mxu0 %v1448
  %v1512 = vpop.f32.mrf.mxu0
  %v1513 = vadd.f32 0.0, %v1512
  %1514 = vmatmul.f32.gmra.mxu0 %v1451
  %v1515 = vpop.f32.mrf.mxu0
  %v1516 = vadd.f32 0.0, %v1515
  %1517 = vmatmul.f32.gmra.mxu0 %v1454
  %v1518 = vpop.f32.mrf.mxu0
  %v1519 = vadd.f32 0.0, %v1518
  %1520 = vmatmul.f32.gmra.mxu0 %v1457
  %v1521 = vpop.f32.mrf.mxu0
  %v1522 = vadd.f32 0.0, %v1521
  %1523 = vmatmul.f32.gmra.mxu0 %v1460
  %v1524 = vpop.f32.mrf.mxu0
  %v1525 = vadd.f32 0.0, %v1524
  %1526 = vmatmul.f32.gmra.mxu0 %v1463
  %v1527 = vpop.f32.mrf.mxu0
  %v1528 = vadd.f32 0.0, %v1527
  %1529 = vmatmul.f32.gmra.mxu0 %v1466
  %v1530 = vpop.f32.mrf.mxu0
  %v1531 = vadd.f32 0.0, %v1530
  %1532 = vmatmul.f32.gmra.mxu0 %v1469
  %v1533 = vpop.f32.mrf.mxu0
  %v1534 = vadd.f32 0.0, %v1533
  %1535 = vdwg.mxu0
  %1536 = vst.msk [vmem:[%s5] sm:$0xff] %vm1362, %v1489
  %1537 = vst.msk [vmem:[%s5 + $0x8] sm:$0xff] %vm1362, %v1492
  %1538 = vst.msk [vmem:[%s5 + $0x10] sm:$0xff] %vm1362, %v1495
  %1539 = vst.msk [vmem:[%s5 + $0x18] sm:$0xff] %vm1362, %v1498
  %1540 = vst.msk [vmem:[%s5 + $0x20] sm:$0xff] %vm1362, %v1501
  %1541 = vst.msk [vmem:[%s5 + $0x28] sm:$0xff] %vm1362, %v1504
  %1542 = vst.msk [vmem:[%s5 + $0x30] sm:$0xff] %vm1362, %v1507
  %1543 = vst.msk [vmem:[%s5 + $0x38] sm:$0xff] %vm1362, %v1510
  %1544 = vst.msk [vmem:[%s5 + $0x40] sm:$0xff] %vm1362, %v1513
  %1545 = vst.msk [vmem:[%s5 + $0x48] sm:$0xff] %vm1362, %v1516
  %1546 = vst.msk [vmem:[%s5 + $0x50] sm:$0xff] %vm1362, %v1519
  %1547 = vst.msk [vmem:[%s5 + $0x58] sm:$0xff] %vm1362, %v1522
  %1548 = vst.msk [vmem:[%s5 + $0x60] sm:$0xff] %vm1362, %v1525
  %1549 = vst.msk [vmem:[%s5 + $0x68] sm:$0xff] %vm1362, %v1528
  %1550 = vst.msk [vmem:[%s5 + $0x70] sm:$0xff] %vm1362, %v1531
  %1551 = vst.msk [vmem:[%s5 + $0x78] sm:$0xff] %vm1362, %v1534
  // Predicated region
  $region22: #{tpu_custom_call.1} parent=0 // pred_check
    _
  $region23: #{tpu_custom_call.1} parent=0 // pred_check_branch
    %1553 = sbr.rel (0) target = $region25
  $region24: #{tpu_custom_call.1} parent=0 // pred_region
    _
  $region25: #{tpu_custom_call.1} parent=0 // pred_fallthru
    _
  // Predicated region
  $region26: #{tpu_custom_call.1} parent=0 // pred_check
    _
  $region27: #{tpu_custom_call.1} parent=0 // pred_check_branch
    %1555 = sbr.rel (0) target = $region29
  $region28: #{tpu_custom_call.1} parent=0 // pred_region
    _
  $region29: #{tpu_custom_call.1} parent=0 // pred_fallthru
    _

</llo_original>
